<compile_context>
chip_gen: v5e
topology: v5e:2x2
jax: 0.10.0
libtpu: 0.0.40
codegen_flags: <defaults>
</compile_context>

<pallas_src>
import functools

import jax
import jax.numpy as jnp
from jax.experimental import pallas as pl
from jax.experimental.pallas import tpu as pltpu

HIDDEN = 64
INNER = 16
_INV_SQRT2 = 0.7071067811865476


def _exact_gelu(x):
    # PyTorch nn.GELU() default is the exact (erf-based) formulation.
    return 0.5 * x * (1.0 + jax.lax.erf(x * _INV_SQRT2))


def four_mlp_kernel(xT_ref, w1s_ref, w2s_ref, oT_ref):
    # xT_ref : (HIDDEN, TB)      features on sublanes, batch tile on lanes
    # w1s_ref: (4, INNER, HIDDEN) fc1.weight for each MLP (PyTorch layout)
    # w2s_ref: (4, HIDDEN, INNER) fc2.weight for each MLP (PyTorch layout)
    # oT_ref : (HIDDEN, TB)
    h = xT_ref[...].astype(jnp.float32)                    # (HIDDEN, TB)
    for i in range(4):                                     # static unroll over the 4 MLPs
        # (fc1(x))^T = W1 @ x^T
        t = jnp.dot(w1s_ref[i].astype(jnp.float32), h,
                    preferred_element_type=jnp.float32)    # (INNER, TB)
        t = _exact_gelu(t)
        # (fc2(t))^T = W2 @ t^T
        h = jnp.dot(w2s_ref[i].astype(jnp.float32), t,
                    preferred_element_type=jnp.float32)    # (HIDDEN, TB)
    oT_ref[...] = h.astype(oT_ref.dtype)


def make_four_mlp_params(hidden=HIDDEN, dtype=jnp.float32):
    """Deterministic parameters matching FourMLP.__init__ (PyTorch weight layout).

    MLP i (value = i): fc1.weight (16, hidden) filled with value,
                       fc2.weight (hidden, 16) filled with 2*value.
    Stacked into two arrays so they are passed (and DMA'd) once.
    """
    w1s = jnp.stack([jnp.full((INNER, hidden), v, dtype=dtype)
                     for v in (1.0, 2.0, 3.0, 4.0)])        # (4, 16, hidden)
    w2s = jnp.stack([jnp.full((hidden, INNER), 2.0 * v, dtype=dtype)
                     for v in (1.0, 2.0, 3.0, 4.0)])        # (4, hidden, 16)
    return w1s, w2s


@functools.partial(jax.jit, static_argnames=("tb",))
def four_mlp_forward(x, w1s, w2s, *, tb=4096):
    """x: (batch, hidden) -> (batch, hidden)."""
    batch, hidden = x.shape

    # Lane-dense layout: (hidden, batch).
    xT = x.T

    # Pad batch up to a multiple of 128 (lane width), pick the batch tile,
    # then pad up to a multiple of the tile.
    bp = pl.cdiv(batch, 128) * 128
    tb = min(tb, bp)
    bp = pl.cdiv(bp, tb) * tb
    if bp != batch:
        # Zero padding is exact: no biases, gelu(0) == 0, so padded columns stay 0.
        xT = jnp.pad(xT, ((0, 0), (0, bp - batch)))

    grid = (bp // tb,)
    oT = pl.pallas_call(
        four_mlp_kernel,
        out_shape=jax.ShapeDtypeStruct((hidden, bp), x.dtype),
        grid=grid,
        in_specs=[
            pl.BlockSpec((hidden, tb), lambda i: (0, i)),      # batch-tiled activations
            pl.BlockSpec(w1s.shape, lambda i: (0, 0, 0)),      # resident weights
            pl.BlockSpec(w2s.shape, lambda i: (0, 0, 0)),      # resident weights
        ],
        out_specs=pl.BlockSpec((hidden, tb), lambda i: (0, i)),
        compiler_params=pltpu.CompilerParams(
            dimension_semantics=("parallel",)),                # shard grid across TCs (v7x)
    )(xT, w1s, w2s)

    return oT[:, :batch].T


def four_mlp_reference(x, w1s, w2s):
    """Plain-JAX reference mirroring the PyTorch forward (x @ W^T)."""
    h = x.astype(jnp.float32)
    for i in range(4):
        t = jnp.dot(h, w1s[i].T, precision=jax.lax.Precision.HIGHEST)
        t = _exact_gelu(t)
        h = jnp.dot(t, w2s[i].T, precision=jax.lax.Precision.HIGHEST)
    return h.astype(x.dtype)


if __name__ == "__main__":
    # Small shapes, but chosen so the batch grid (2 steps) and padding paths
    # are exercised: batch=384 with a 256-row tile -> padded to 512.
    batch = 384
    key = jax.random.PRNGKey(0)
    # Small input values so the constant-filled weights don't blow up numerically.
    x = jax.random.normal(key, (batch, HIDDEN), dtype=jnp.float32) * 0.001

    w1s, w2s = make_four_mlp_params(HIDDEN)

    out = four_mlp_forward(x, w1s, w2s, tb=256)
    out = jax.block_until_ready(out)

    ref = four_mlp_reference(x, w1s, w2s)
    assert out.shape == (batch, HIDDEN)
    rel_err = jnp.max(jnp.abs(out - ref)) / (jnp.max(jnp.abs(ref)) + 1e-30)
    assert rel_err < 2e-3, f"relative error = {rel_err}"

    print("KERNEL_OK")
</pallas_src>

<mosaic_0001>
module attributes {stable_mosaic.version = 11 : i64} {
  func.func @four_mlp_kernel(%arg0: i32, %arg1: memref<64x256xf32, #tpu.memory_space<vmem>>, %arg2: memref<4x16x64xf32, #tpu.memory_space<vmem>>, %arg3: memref<4x64x16xf32, #tpu.memory_space<vmem>>, %arg4: memref<64x256xf32, #tpu.memory_space<vmem>>) attributes {dimension_semantics = [#tpu.dimension_semantics<parallel>], iteration_bounds = array<i64: 2>, scalar_prefetch = 0 : i64, scratch_operands = 0 : i64, tpu.core_type = #tpu.core_type<tc>, window_params = [{transform_indices = @transform_0, window_bounds = array<i64: 64, 256>}, {pipeline_mode = #tpu.pipeline_mode<synchronous>, transform_indices = @transform_1, window_bounds = array<i64: 4, 16, 64>}, {pipeline_mode = #tpu.pipeline_mode<synchronous>, transform_indices = @transform_2, window_bounds = array<i64: 4, 64, 16>}, {transform_indices = @transform_3, window_bounds = array<i64: 64, 256>}]} {
    %c0 = arith.constant 0 : index
    %c0_0 = arith.constant 0 : index
    %0 = vector.load %arg1[%c0, %c0_0] : memref<64x256xf32, #tpu.memory_space<vmem>>, vector<64x256xf32>
    %c0_1 = arith.constant 0 : index
    %c0_2 = arith.constant 0 : index
    %c0_3 = arith.constant 0 : index
    %1 = vector.load %arg2[%c0_1, %c0_2, %c0_3] : memref<4x16x64xf32, #tpu.memory_space<vmem>>, vector<1x16x64xf32>
    %2 = vector.shape_cast %1 : vector<1x16x64xf32> to vector<16x64xf32>
    %cst = arith.constant dense<0.000000e+00> : vector<16x256xf32>
    %3 = tpu.matmul %2, %0, %cst {dimension_numbers = #tpu.dot_dimension_numbers<[1], [0], [0], [1], [0, 0, 1, 1], [], []>} : vector<16x64xf32>, vector<64x256xf32>, vector<16x256xf32> -> vector<16x256xf32>
    %cst_4 = arith.constant 5.000000e-01 : f32
    %4 = vector.broadcast %cst_4 : f32 to vector<16x256xf32>
    %5 = arith.mulf %4, %3 : vector<16x256xf32>
    %cst_5 = arith.constant 0.707106769 : f32
    %6 = vector.broadcast %cst_5 : f32 to vector<16x256xf32>
    %7 = arith.mulf %3, %6 : vector<16x256xf32>
    %8 = math.erf %7 : vector<16x256xf32>
    %cst_6 = arith.constant 1.000000e+00 : f32
    %9 = vector.broadcast %cst_6 : f32 to vector<16x256xf32>
    %10 = arith.addf %9, %8 : vector<16x256xf32>
    %11 = arith.mulf %5, %10 : vector<16x256xf32>
    %c0_7 = arith.constant 0 : index
    %c0_8 = arith.constant 0 : index
    %c0_9 = arith.constant 0 : index
    %12 = vector.load %arg3[%c0_7, %c0_8, %c0_9] : memref<4x64x16xf32, #tpu.memory_space<vmem>>, vector<1x64x16xf32>
    %13 = vector.shape_cast %12 : vector<1x64x16xf32> to vector<64x16xf32>
    %cst_10 = arith.constant dense<0.000000e+00> : vector<64x256xf32>
    %14 = tpu.matmul %13, %11, %cst_10 {dimension_numbers = #tpu.dot_dimension_numbers<[1], [0], [0], [1], [0, 0, 1, 1], [], []>} : vector<64x16xf32>, vector<16x256xf32>, vector<64x256xf32> -> vector<64x256xf32>
    %c1 = arith.constant 1 : index
    %c0_11 = arith.constant 0 : index
    %c0_12 = arith.constant 0 : index
    %15 = vector.load %arg2[%c1, %c0_11, %c0_12] : memref<4x16x64xf32, #tpu.memory_space<vmem>>, vector<1x16x64xf32>
    %16 = vector.shape_cast %15 : vector<1x16x64xf32> to vector<16x64xf32>
    %cst_13 = arith.constant dense<0.000000e+00> : vector<16x256xf32>
    %17 = tpu.matmul %16, %14, %cst_13 {dimension_numbers = #tpu.dot_dimension_numbers<[1], [0], [0], [1], [0, 0, 1, 1], [], []>} : vector<16x64xf32>, vector<64x256xf32>, vector<16x256xf32> -> vector<16x256xf32>
    %cst_14 = arith.constant 5.000000e-01 : f32
    %18 = vector.broadcast %cst_14 : f32 to vector<16x256xf32>
    %19 = arith.mulf %18, %17 : vector<16x256xf32>
    %cst_15 = arith.constant 0.707106769 : f32
    %20 = vector.broadcast %cst_15 : f32 to vector<16x256xf32>
    %21 = arith.mulf %17, %20 : vector<16x256xf32>
    %22 = math.erf %21 : vector<16x256xf32>
    %cst_16 = arith.constant 1.000000e+00 : f32
    %23 = vector.broadcast %cst_16 : f32 to vector<16x256xf32>
    %24 = arith.addf %23, %22 : vector<16x256xf32>
    %25 = arith.mulf %19, %24 : vector<16x256xf32>
    %c1_17 = arith.constant 1 : index
    %c0_18 = arith.constant 0 : index
    %c0_19 = arith.constant 0 : index
    %26 = vector.load %arg3[%c1_17, %c0_18, %c0_19] : memref<4x64x16xf32, #tpu.memory_space<vmem>>, vector<1x64x16xf32>
    %27 = vector.shape_cast %26 : vector<1x64x16xf32> to vector<64x16xf32>
    %cst_20 = arith.constant dense<0.000000e+00> : vector<64x256xf32>
    %28 = tpu.matmul %27, %25, %cst_20 {dimension_numbers = #tpu.dot_dimension_numbers<[1], [0], [0], [1], [0, 0, 1, 1], [], []>} : vector<64x16xf32>, vector<16x256xf32>, vector<64x256xf32> -> vector<64x256xf32>
    %c2 = arith.constant 2 : index
    %c0_21 = arith.constant 0 : index
    %c0_22 = arith.constant 0 : index
    %29 = vector.load %arg2[%c2, %c0_21, %c0_22] : memref<4x16x64xf32, #tpu.memory_space<vmem>>, vector<1x16x64xf32>
    %30 = vector.shape_cast %29 : vector<1x16x64xf32> to vector<16x64xf32>
    %cst_23 = arith.constant dense<0.000000e+00> : vector<16x256xf32>
    %31 = tpu.matmul %30, %28, %cst_23 {dimension_numbers = #tpu.dot_dimension_numbers<[1], [0], [0], [1], [0, 0, 1, 1], [], []>} : vector<16x64xf32>, vector<64x256xf32>, vector<16x256xf32> -> vector<16x256xf32>
    %cst_24 = arith.constant 5.000000e-01 : f32
    %32 = vector.broadcast %cst_24 : f32 to vector<16x256xf32>
    %33 = arith.mulf %32, %31 : vector<16x256xf32>
    %cst_25 = arith.constant 0.707106769 : f32
    %34 = vector.broadcast %cst_25 : f32 to vector<16x256xf32>
    %35 = arith.mulf %31, %34 : vector<16x256xf32>
    %36 = math.erf %35 : vector<16x256xf32>
    %cst_26 = arith.constant 1.000000e+00 : f32
    %37 = vector.broadcast %cst_26 : f32 to vector<16x256xf32>
    %38 = arith.addf %37, %36 : vector<16x256xf32>
    %39 = arith.mulf %33, %38 : vector<16x256xf32>
    %c2_27 = arith.constant 2 : index
    %c0_28 = arith.constant 0 : index
    %c0_29 = arith.constant 0 : index
    %40 = vector.load %arg3[%c2_27, %c0_28, %c0_29] : memref<4x64x16xf32, #tpu.memory_space<vmem>>, vector<1x64x16xf32>
    %41 = vector.shape_cast %40 : vector<1x64x16xf32> to vector<64x16xf32>
    %cst_30 = arith.constant dense<0.000000e+00> : vector<64x256xf32>
    %42 = tpu.matmul %41, %39, %cst_30 {dimension_numbers = #tpu.dot_dimension_numbers<[1], [0], [0], [1], [0, 0, 1, 1], [], []>} : vector<64x16xf32>, vector<16x256xf32>, vector<64x256xf32> -> vector<64x256xf32>
    %c3 = arith.constant 3 : index
    %c0_31 = arith.constant 0 : index
    %c0_32 = arith.constant 0 : index
    %43 = vector.load %arg2[%c3, %c0_31, %c0_32] : memref<4x16x64xf32, #tpu.memory_space<vmem>>, vector<1x16x64xf32>
    %44 = vector.shape_cast %43 : vector<1x16x64xf32> to vector<16x64xf32>
    %cst_33 = arith.constant dense<0.000000e+00> : vector<16x256xf32>
    %45 = tpu.matmul %44, %42, %cst_33 {dimension_numbers = #tpu.dot_dimension_numbers<[1], [0], [0], [1], [0, 0, 1, 1], [], []>} : vector<16x64xf32>, vector<64x256xf32>, vector<16x256xf32> -> vector<16x256xf32>
    %cst_34 = arith.constant 5.000000e-01 : f32
    %46 = vector.broadcast %cst_34 : f32 to vector<16x256xf32>
    %47 = arith.mulf %46, %45 : vector<16x256xf32>
    %cst_35 = arith.constant 0.707106769 : f32
    %48 = vector.broadcast %cst_35 : f32 to vector<16x256xf32>
    %49 = arith.mulf %45, %48 : vector<16x256xf32>
    %50 = math.erf %49 : vector<16x256xf32>
    %cst_36 = arith.constant 1.000000e+00 : f32
    %51 = vector.broadcast %cst_36 : f32 to vector<16x256xf32>
    %52 = arith.addf %51, %50 : vector<16x256xf32>
    %53 = arith.mulf %47, %52 : vector<16x256xf32>
    %c3_37 = arith.constant 3 : index
    %c0_38 = arith.constant 0 : index
    %c0_39 = arith.constant 0 : index
    %54 = vector.load %arg3[%c3_37, %c0_38, %c0_39] : memref<4x64x16xf32, #tpu.memory_space<vmem>>, vector<1x64x16xf32>
    %55 = vector.shape_cast %54 : vector<1x64x16xf32> to vector<64x16xf32>
    %cst_40 = arith.constant dense<0.000000e+00> : vector<64x256xf32>
    %56 = tpu.matmul %55, %53, %cst_40 {dimension_numbers = #tpu.dot_dimension_numbers<[1], [0], [0], [1], [0, 0, 1, 1], [], []>} : vector<64x16xf32>, vector<16x256xf32>, vector<64x256xf32> -> vector<64x256xf32>
    %c0_41 = arith.constant 0 : index
    %c0_42 = arith.constant 0 : index
    %57 = vector.load %arg4[%c0_41, %c0_42] : memref<64x256xf32, #tpu.memory_space<vmem>>, vector<64x256xf32>
    tpu.vector_store %arg4[%c0_41, %c0_42], %56 {strides = array<i32>} : memref<64x256xf32, #tpu.memory_space<vmem>>, vector<64x256xf32>,
    return
  }
  func.func @transform_0(%arg0: i32) -> (i32, i32) {
    %c0_i32 = arith.constant 0 : i32
    %c0_i32_0 = arith.constant 0 : i32
    return %c0_i32, %arg0 : i32, i32
  }
  func.func @transform_1(%arg0: i32) -> (i32, i32, i32) {
    %c0_i32 = arith.constant 0 : i32
    %c0_i32_0 = arith.constant 0 : i32
    %c0_i32_1 = arith.constant 0 : i32
    %c0_i32_2 = arith.constant 0 : i32
    return %c0_i32, %c0_i32_0, %c0_i32_1 : i32, i32, i32
  }
  func.func @transform_2(%arg0: i32) -> (i32, i32, i32) {
    %c0_i32 = arith.constant 0 : i32
    %c0_i32_0 = arith.constant 0 : i32
    %c0_i32_1 = arith.constant 0 : i32
    %c0_i32_2 = arith.constant 0 : i32
    return %c0_i32, %c0_i32_0, %c0_i32_1 : i32, i32, i32
  }
  func.func @transform_3(%arg0: i32) -> (i32, i32) {
    %c0_i32 = arith.constant 0 : i32
    %c0_i32_0 = arith.constant 0 : i32
    return %c0_i32, %arg0 : i32, i32
  }
}

</mosaic_0001>

<llo_original>
// kernel: four_mlp_forward.1
$region0: #{four_mlp_forward.1}
  #allocation0 [shape = 'u32[]', space=smem, size = 0x4, offset = 0x4, fixed_abs, tag = 'smem constant byte address 0x4 - core index']
  #allocation1 [shape = 'u32[72,128]{1,0:T(1,128)}', space=vmem, size = 0x9000, scoped, tag = 'internal scratch']
  %s0 = inlined_call_operand.vmem [shape: f32[64,512], index: 0, kind: input, shape index: {}]
  %s1 = inlined_call_operand.vmem [shape: f32[4,16,64], index: 1, kind: input, shape index: {}]
  %s2 = inlined_call_operand.vmem [shape: f32[4,64,16], index: 2, kind: input, shape index: {}]
  %s3 = inlined_call_operand.vmem [shape: f32[64,512], index: 3, kind: output, shape index: {}]
  %s4 = sld [smem:[#allocation0]]
  $region87: #{four_mlp_forward.1} parent=0
    _
  %s6 = ssub.s32 1, %s4
  %s7 = scalar_select 0, %s6, %s4
  $region1: #{four_mlp_forward.1} parent=0
    #allocation2 [shape = 'u8[131072]{0}', space=vmem, size = 0x20000, scoped, tag = 'input window, operand 0']
    #allocation3 [shape = 'u8[131072]{0}', space=vmem, size = 0x20000, scoped, tag = 'output window, operand 0']
    loop: start=0, step=1, limit=4
    $region2: #{four_mlp_forward.1} parent=1 // loop_pre_header
      _
    $region3: #{four_mlp_forward.1} parent=1 // loop_header
      %s9 = sphi 0, %s13
      %p10 = scmp.ge.s32.totalorder %s9, 4
      %s19 = sphi 0, %s21
      %s22 = sphi 0, %s19
      %s23 = sphi 0, %s22
      %s39 = sphi 0, %s23
      %s43 = sphi 0, %s43
      %s45 = sphi 0, %s43
      %s46 = sphi 0, %s45
      %s60 = sphi 0, %s46
      %s64 = sphi 0, %s64
      %s66 = sphi 0, %s64
      %s67 = sphi 0, %s66
      %s81 = sphi 0, %s67
      %s87 = sphi 0, %s89
      %s90 = sphi 0, %s87
      %s91 = sphi 0, %s90
      %s107 = sphi 0, %s91
    $region4: #{four_mlp_forward.1} parent=1 // loop_header_branch
      %12 = sbr.rel (%p10) target = $region8
    $region5: #{four_mlp_forward.1} parent=1 // loop_body
      %s14 = ssub.s32 %s9, 1
      %s15 = ssub.s32 %s9, 2
      %s16 = sadd.s32 %s9, 1
      %s17 = ssub.s32 %s9, %s16
      %p18 = scmp.eq.s32.totalorder %s17, 0
      %s20 = sadd.s32 %s19, 1
      %s21 = scalar_select %p18, %s19, %s20
      %p24 = pneg %p18
      %p25 = scmp.eq.s32.totalorder %s9, 1
      %p26 = por %p24, %p25
      %p27 = scmp.ne.s32.totalorder %s19, %s22
      %p28 = scmp.eq.s32.totalorder %s9, 0
      %p29 = por %p27, %p28
      %p30 = scmp.ne.s32.totalorder %s19, %s22
      %p31 = scmp.eq.s32.totalorder %s14, 1
      %p32 = por %p30, %p31
      %p33 = scmp.ne.s32.totalorder %s22, %s23
      %p34 = scmp.eq.s32.totalorder %s14, 0
      %p35 = por %p33, %p34
      %p36 = scmp.ne.s32.totalorder %s22, %s23
      %p37 = scmp.eq.s32.totalorder %s15, 1
      %p38 = por %p36, %p37
      %p40 = scmp.ne.s32.totalorder %s23, %s39
      %p41 = scmp.eq.s32.totalorder %s15, 0
      %p42 = por %p40, %p41
      %s44 = sadd.s32 %s43, 1
      %p47 = scmp.eq.s32.totalorder %s9, 1
      %p48 = scmp.ne.s32.totalorder %s43, %s45
      %p49 = scmp.eq.s32.totalorder %s9, 0
      %p50 = por %p48, %p49
      %p51 = scmp.ne.s32.totalorder %s43, %s45
      %p52 = scmp.eq.s32.totalorder %s14, 1
      %p53 = por %p51, %p52
      %p54 = scmp.ne.s32.totalorder %s45, %s46
      %p55 = scmp.eq.s32.totalorder %s14, 0
      %p56 = por %p54, %p55
      %p57 = scmp.ne.s32.totalorder %s45, %s46
      %p58 = scmp.eq.s32.totalorder %s15, 1
      %p59 = por %p57, %p58
      %p61 = scmp.ne.s32.totalorder %s46, %s60
      %p62 = scmp.eq.s32.totalorder %s15, 0
      %p63 = por %p61, %p62
      %s65 = sadd.s32 %s64, 1
      %p68 = scmp.eq.s32.totalorder %s9, 1
      %p69 = scmp.ne.s32.totalorder %s64, %s66
      %p70 = scmp.eq.s32.totalorder %s9, 0
      %p71 = por %p69, %p70
      %p72 = scmp.ne.s32.totalorder %s64, %s66
      %p73 = scmp.eq.s32.totalorder %s14, 1
      %p74 = por %p72, %p73
      %p75 = scmp.ne.s32.totalorder %s66, %s67
      %p76 = scmp.eq.s32.totalorder %s14, 0
      %p77 = por %p75, %p76
      %p78 = scmp.ne.s32.totalorder %s66, %s67
      %p79 = scmp.eq.s32.totalorder %s15, 1
      %p80 = por %p78, %p79
      %p82 = scmp.ne.s32.totalorder %s67, %s81
      %p83 = scmp.eq.s32.totalorder %s15, 0
      %p84 = por %p82, %p83
      %s85 = ssub.s32 %s9, %s16
      %p86 = scmp.eq.s32.totalorder %s85, 0
      %s88 = sadd.s32 %s87, 1
      %s89 = scalar_select %p86, %s87, %s88
      %p92 = pneg %p86
      %p93 = scmp.eq.s32.totalorder %s9, 1
      %p94 = por %p92, %p93
      %p95 = scmp.ne.s32.totalorder %s87, %s90
      %p96 = scmp.eq.s32.totalorder %s9, 0
      %p97 = por %p95, %p96
      %p98 = scmp.ne.s32.totalorder %s87, %s90
      %p99 = scmp.eq.s32.totalorder %s14, 1
      %p100 = por %p98, %p99
      %p101 = scmp.ne.s32.totalorder %s90, %s91
      %p102 = scmp.eq.s32.totalorder %s14, 0
      %p103 = por %p101, %p102
      %p104 = scmp.ne.s32.totalorder %s90, %s91
      %p105 = scmp.eq.s32.totalorder %s15, 1
      %p106 = por %p104, %p105
      %p108 = scmp.ne.s32.totalorder %s91, %s107
      %p109 = scmp.eq.s32.totalorder %s15, 0
      %p110 = por %p108, %p109
      %p111 = scmp.le.s32.totalorder 1, %s9
      %p112 = scmp.lt.s32.totalorder %s9, 3
      %p113 = pnand %p111, %p112
      %p114 = pneg %p113
      // Predicated region
      $region9: #{four_mlp_forward.1} parent=5 // pred_check
        _
      $region10: #{four_mlp_forward.1} parent=5 // pred_check_branch
        %116 = sbr.rel (%p113) target = $region12
      $region11: #{four_mlp_forward.1} parent=5 // pred_region
        %s117 = ssub.s32 %s9, 1
        // Predicated region
        $region13: #{four_mlp_forward.1} parent=11 // pred_check
          %p118 = pneg %p56
        $region14: #{four_mlp_forward.1} parent=11 // pred_check_branch
          %120 = sbr.rel (%p118) target = $region16
        $region15: #{four_mlp_forward.1} parent=11 // pred_region
          _
        $region16: #{four_mlp_forward.1} parent=11 // pred_fallthru
          _
        // Predicated region
        $region17: #{four_mlp_forward.1} parent=11 // pred_check
          %p121 = pneg %p77
        $region18: #{four_mlp_forward.1} parent=11 // pred_check_branch
          %123 = sbr.rel (%p121) target = $region20
        $region19: #{four_mlp_forward.1} parent=11 // pred_region
          _
        $region20: #{four_mlp_forward.1} parent=11 // pred_fallthru
          _
      $region12: #{four_mlp_forward.1} parent=5 // pred_fallthru
        _
      %p124 = scmp.lt.s32.totalorder %s9, 2
      // Predicated region
      $region21: #{four_mlp_forward.1} parent=5 // pred_check
        %p125 = pneg %p124
      $region22: #{four_mlp_forward.1} parent=5 // pred_check_branch
        %127 = sbr.rel (%p125) target = $region24
      $region23: #{four_mlp_forward.1} parent=5 // pred_region
        // Predicated region
        $region25: #{four_mlp_forward.1} parent=23 // pred_check
          %p128 = pneg %p29
        $region26: #{four_mlp_forward.1} parent=23 // pred_check_branch
          %130 = sbr.rel (%p128) target = $region28
        $region27: #{four_mlp_forward.1} parent=23 // pred_region
          %s131 = sand.u32 %s19, 1
          %s132 = sand.u32 %s19, 1
          %s133 = smul.addr %s132, 128
          %s134 = scalar_lea.vmem [#allocation2], %s133
          %s135 = smul.u32 2, %s9
          %s136 = smul.addr %s135, 8
          %s137 = scalar_lea.vmem %s0, %s136
          // Predicated region
          $region29: #{four_mlp_forward.1} parent=27 // pred_check
            _
          $region30: #{four_mlp_forward.1} parent=27 // pred_check_branch
            %139 = sbr.rel (0) target = $region32
          $region31: #{four_mlp_forward.1} parent=27 // pred_region
            // Predicated region
            $region33: #{four_mlp_forward.1} parent=31 // pred_check
              _
            $region34: #{four_mlp_forward.1} parent=31 // pred_check_branch
              %141 = sbr.rel (0) target = $region36
            $region35: #{four_mlp_forward.1} parent=31 // pred_region
              loop: start=0, step=1, limit=1
              $region37: #{four_mlp_forward.1} parent=35 // loop_pre_header
                _
              $region38: #{four_mlp_forward.1} parent=35 // loop_header
                %s143 = sphi 0, %s147
                %p144 = scmp.ge.s32.totalorder %s143, 1
                %s148 = sphi %s137, %s137
                %s149 = sphi %s134, %s134
              $region39: #{four_mlp_forward.1} parent=35 // loop_header_branch
                %146 = sbr.rel (%p144) target = $region43
              $region40: #{four_mlp_forward.1} parent=35 // loop_body
                %v150 = vld [vmem:[%s148] sm:$0xff]
                %151 = vst [vmem:[%s149] sm:$0xff] %v150
                %v152 = vld [vmem:[%s148 + $0x8] sm:$0xff]
                %153 = vst [vmem:[%s149 + $0x8] sm:$0xff] %v152
                %v154 = vld [vmem:[%s148 + $0x20] sm:$0xff]
                %155 = vst [vmem:[%s149 + $0x10] sm:$0xff] %v154
                %v156 = vld [vmem:[%s148 + $0x28] sm:$0xff]
                %157 = vst [vmem:[%s149 + $0x18] sm:$0xff] %v156
                %v158 = vld [vmem:[%s148 + $0x40] sm:$0xff]
                %159 = vst [vmem:[%s149 + $0x20] sm:$0xff] %v158
                %v160 = vld [vmem:[%s148 + $0x48] sm:$0xff]
                %161 = vst [vmem:[%s149 + $0x28] sm:$0xff] %v160
                %v162 = vld [vmem:[%s148 + $0x60] sm:$0xff]
                %163 = vst [vmem:[%s149 + $0x30] sm:$0xff] %v162
                %v164 = vld [vmem:[%s148 + $0x68] sm:$0xff]
                %165 = vst [vmem:[%s149 + $0x38] sm:$0xff] %v164
                %v166 = vld [vmem:[%s148 + $0x80] sm:$0xff]
                %167 = vst [vmem:[%s149 + $0x40] sm:$0xff] %v166
                %v168 = vld [vmem:[%s148 + $0x88] sm:$0xff]
                %169 = vst [vmem:[%s149 + $0x48] sm:$0xff] %v168
                %v170 = vld [vmem:[%s148 + $0xa0] sm:$0xff]
                %171 = vst [vmem:[%s149 + $0x50] sm:$0xff] %v170
                %v172 = vld [vmem:[%s148 + $0xa8] sm:$0xff]
                %173 = vst [vmem:[%s149 + $0x58] sm:$0xff] %v172
                %v174 = vld [vmem:[%s148 + $0xc0] sm:$0xff]
                %175 = vst [vmem:[%s149 + $0x60] sm:$0xff] %v174
                %v176 = vld [vmem:[%s148 + $0xc8] sm:$0xff]
                %177 = vst [vmem:[%s149 + $0x68] sm:$0xff] %v176
                %v178 = vld [vmem:[%s148 + $0xe0] sm:$0xff]
                %179 = vst [vmem:[%s149 + $0x70] sm:$0xff] %v178
                %v180 = vld [vmem:[%s148 + $0xe8] sm:$0xff]
                %181 = vst [vmem:[%s149 + $0x78] sm:$0xff] %v180
              $region41: #{four_mlp_forward.1} parent=35 // loop_footer
                %s147 = sadd.s32 1, %s143
              $region42: #{four_mlp_forward.1} parent=35 // loop_footer_branch
                %142 = sbr.rel target = $region38
              $region43: #{four_mlp_forward.1} parent=35 // loop_exit
                _
            $region36: #{four_mlp_forward.1} parent=31 // pred_fallthru
              _
            // Predicated region
            $region44: #{four_mlp_forward.1} parent=31 // pred_check
              _
            $region45: #{four_mlp_forward.1} parent=31 // pred_check_branch
              %183 = sbr.rel target = $region47
            $region46: #{four_mlp_forward.1} parent=31 // pred_region
              _
            $region47: #{four_mlp_forward.1} parent=31 // pred_fallthru
              _
          $region32: #{four_mlp_forward.1} parent=27 // pred_fallthru
            _
          %184 = vnop
        $region28: #{four_mlp_forward.1} parent=23 // pred_fallthru
          _
      $region24: #{four_mlp_forward.1} parent=5 // pred_fallthru
        _
      %p185 = scmp.le.s32.totalorder 1, %s9
      %p186 = scmp.lt.s32.totalorder %s9, 3
      %p187 = pnand %p185, %p186
      %p188 = pneg %p187
      // Predicated region
      $region48: #{four_mlp_forward.1} parent=5 // pred_check
        _
      $region49: #{four_mlp_forward.1} parent=5 // pred_check_branch
        %190 = sbr.rel (%p187) target = $region51
      $region50: #{four_mlp_forward.1} parent=5 // pred_region
        %s191 = ssub.s32 %s9, 1
        %s192 = sand.u32 %s22, 1
        %s193 = sand.u32 %s22, 1
        %s194 = smul.addr %s193, 128
        %s195 = scalar_lea.vmem [#allocation2], %s194
        // Predicated region
        $region52: #{four_mlp_forward.1} parent=50 // pred_check
          %p196 = pneg %p35
        $region53: #{four_mlp_forward.1} parent=50 // pred_check_branch
          %198 = sbr.rel (%p196) target = $region55
        $region54: #{four_mlp_forward.1} parent=50 // pred_region
          _
        $region55: #{four_mlp_forward.1} parent=50 // pred_fallthru
          _
        %s199 = sand.u32 %s22, 1
        %s200 = sand.u32 %s22, 1
        %s201 = smul.addr %s200, 128
        %s202 = scalar_lea.vmem [#allocation2], %s201
        %p203 = pneg %p35
        %p204 = pneg %p32
        %p205 = pneg %p56
        %p206 = pneg %p53
        %p207 = pneg %p77
        %p208 = pneg %p74
        %p209 = pneg %p103
        %p210 = pneg %p100
        %s211 = sand.u32 %s90, 1
        %s212 = sand.u32 %s90, 1
        %s213 = smul.addr %s212, 128
        %s214 = scalar_lea.vmem [#allocation3], %s213
        %s215 = smul.u32 2, %s14
        %s216 = smul.u32 2, %s14
        %v217 = vld [vmem:[%s195] sm:$0xff]
        %v218 = vld [vmem:[%s195 + $0x8] sm:$0xff]
        %v219 = vld [vmem:[%s195 + $0x10] sm:$0xff]
        %v220 = vld [vmem:[%s195 + $0x18] sm:$0xff]
        %v221 = vld [vmem:[%s195 + $0x20] sm:$0xff]
        %v222 = vld [vmem:[%s195 + $0x28] sm:$0xff]
        %v223 = vld [vmem:[%s195 + $0x30] sm:$0xff]
        %v224 = vld [vmem:[%s195 + $0x38] sm:$0xff]
        %v225 = vld [vmem:[%s195 + $0x40] sm:$0xff]
        %v226 = vld [vmem:[%s195 + $0x48] sm:$0xff]
        %v227 = vld [vmem:[%s195 + $0x50] sm:$0xff]
        %v228 = vld [vmem:[%s195 + $0x58] sm:$0xff]
        %v229 = vld [vmem:[%s195 + $0x60] sm:$0xff]
        %v230 = vld [vmem:[%s195 + $0x68] sm:$0xff]
        %v231 = vld [vmem:[%s195 + $0x70] sm:$0xff]
        %v232 = vld [vmem:[%s195 + $0x78] sm:$0xff]
        %v233 = vld [vmem:[%s1] sm:$0xff]
        %v234 = vld [vmem:[%s1 + $0x8] sm:$0xff]
        %vm235 = vcmask 523264
        %v237 = vsel %vm235, %v233, 0
        %v240 = vsel %vm235, %v234, 0
        %242 = vmatpush.msra.mxu0 0.0
        %243 = vmatpush.msra.mxu0 0.0
        %244 = vmatpush.msra.mxu0 0.0
        %245 = vmatpush.msra.mxu0 0.0
        %246 = vmatpush.msra.mxu0 0.0
        %247 = vmatpush.msra.mxu0 0.0
        %248 = vmatpush.msra.mxu0 0.0
        %249 = vmatpush.msra.mxu0 0.0
        %250 = vmatpush.msra.mxu0 %v231
        %251 = vmatpush.msra.mxu0 %v229
        %252 = vmatpush.msra.mxu0 %v227
        %253 = vmatpush.msra.mxu0 %v225
        %254 = vmatpush.msra.mxu0 %v223
        %255 = vmatpush.msra.mxu0 %v221
        %256 = vmatpush.msra.mxu0 %v219
        %257 = vmatpush.msra.mxu0 %v217
        %258 = vmatmul.f32.gmra.mxu0 %v237
        %v259 = vpop.f32.mrf.mxu0
        %v260 = vadd.f32 0.0, %v259
        %261 = vmatmul.f32.gmra.mxu0 %v240
        %v262 = vpop.f32.mrf.mxu0
        %v263 = vadd.f32 0.0, %v262
        %264 = vdwg.mxu0
        %265 = vmatpush.msra.mxu0 0.0
        %266 = vmatpush.msra.mxu0 0.0
        %267 = vmatpush.msra.mxu0 0.0
        %268 = vmatpush.msra.mxu0 0.0
        %269 = vmatpush.msra.mxu0 0.0
        %270 = vmatpush.msra.mxu0 0.0
        %271 = vmatpush.msra.mxu0 0.0
        %272 = vmatpush.msra.mxu0 0.0
        %273 = vmatpush.msra.mxu0 %v232
        %274 = vmatpush.msra.mxu0 %v230
        %275 = vmatpush.msra.mxu0 %v228
        %276 = vmatpush.msra.mxu0 %v226
        %277 = vmatpush.msra.mxu0 %v224
        %278 = vmatpush.msra.mxu0 %v222
        %279 = vmatpush.msra.mxu0 %v220
        %280 = vmatpush.msra.mxu0 %v218
        %281 = vmatmul.f32.gmra.mxu0 %v237
        %v282 = vpop.f32.mrf.mxu0
        %v283 = vadd.f32 0.0, %v282
        %284 = vmatmul.f32.gmra.mxu0 %v240
        %v285 = vpop.f32.mrf.mxu0
        %v286 = vadd.f32 0.0, %v285
        %287 = vdwg.mxu0
        %v288 = vmul.f32 %v260, 0.5
        %v289 = vmul.f32 %v283, 0.5
        %v290 = vmul.f32 %v263, 0.5
        %v291 = vmul.f32 %v286, 0.5
        %v292 = vmul.f32 %v260, 0.70710677
        %v293 = vmul.f32 %v283, 0.70710677
        %v294 = vmul.f32 %v263, 0.70710677
        %v295 = vmul.f32 %v286, 0.70710677
        %v296 = vmul.f32 %v292, %v292
        %v297 = vmin.f32 16.0, %v296
        %v298 = vmul.f32 %v297, 2.1237322e-06
        %v299 = vadd.f32 %v298, 0.00028619796
        %v300 = vmul.f32 %v297, %v299
        %v301 = vadd.f32 %v300, 0.0036580483
        %v302 = vmul.f32 %v297, %v301
        %v303 = vadd.f32 %v302, 0.05243302
        %v304 = vmul.f32 %v297, %v303
        %v305 = vadd.f32 %v304, 0.18741608
        %v306 = vmul.f32 %v297, %v305
        %v307 = vadd.f32 %v306, 1.1283791
        %v308 = vmul.f32 %v292, %v307
        %v309 = vmul.f32 %v297, 3.8918573e-05
        %v310 = vadd.f32 %v309, 0.001143296
        %v311 = vmul.f32 %v297, %v310
        %v312 = vadd.f32 %v311, 0.014752088
        %v313 = vmul.f32 %v297, %v312
        %v314 = vadd.f32 %v313, 0.112945676
        %v315 = vmul.f32 %v297, %v314
        %v316 = vadd.f32 %v315, 0.4994258
        %v317 = vmul.f32 %v297, %v316
        %v318 = vadd.f32 %v317, 1.0
        %v319 = vrcp.pop %v318
        %v320 = vmul.f32 %v318, %v319
        %v321 = vsub.f32 1.0, %v320
        %v322 = vmul.f32 %v319, %v321
        %v323 = vadd.f32 %v319, %v322
        %vm324 = vweird.f32 %v318
        %vm325 = vweird.f32 %v319
        %vm326 = vmor %vm324, %vm325
        %v327 = vsel %vm326, %v319, %v323
        %v328 = vand.u32 2147483647, %v318
        %vm329 = vcmp.eq.f32.partialorder %v328, 8.507059e+37
        %v330 = vand.u32 %v318, 2147483648
        %v331 = vor.u32 1.1754944e-38, %v330
        %v332 = vsel %vm329, %v331, %v327
        %v333 = vmul.f32 %v308, %v332
        %v334 = vmin.f32 %v333, 1.0
        %v335 = vmax.f32 %v334, -1.0
        %v336 = vmul.f32 %v293, %v293
        %v337 = vmin.f32 16.0, %v336
        %v338 = vmul.f32 %v337, 2.1237322e-06
        %v339 = vadd.f32 %v338, 0.00028619796
        %v340 = vmul.f32 %v337, %v339
        %v341 = vadd.f32 %v340, 0.0036580483
        %v342 = vmul.f32 %v337, %v341
        %v343 = vadd.f32 %v342, 0.05243302
        %v344 = vmul.f32 %v337, %v343
        %v345 = vadd.f32 %v344, 0.18741608
        %v346 = vmul.f32 %v337, %v345
        %v347 = vadd.f32 %v346, 1.1283791
        %v348 = vmul.f32 %v293, %v347
        %v349 = vmul.f32 %v337, 3.8918573e-05
        %v350 = vadd.f32 %v349, 0.001143296
        %v351 = vmul.f32 %v337, %v350
        %v352 = vadd.f32 %v351, 0.014752088
        %v353 = vmul.f32 %v337, %v352
        %v354 = vadd.f32 %v353, 0.112945676
        %v355 = vmul.f32 %v337, %v354
        %v356 = vadd.f32 %v355, 0.4994258
        %v357 = vmul.f32 %v337, %v356
        %v358 = vadd.f32 %v357, 1.0
        %v359 = vrcp.pop %v358
        %v360 = vmul.f32 %v358, %v359
        %v361 = vsub.f32 1.0, %v360
        %v362 = vmul.f32 %v359, %v361
        %v363 = vadd.f32 %v359, %v362
        %vm364 = vweird.f32 %v358
        %vm365 = vweird.f32 %v359
        %vm366 = vmor %vm364, %vm365
        %v367 = vsel %vm366, %v359, %v363
        %v368 = vand.u32 2147483647, %v358
        %vm369 = vcmp.eq.f32.partialorder %v368, 8.507059e+37
        %v370 = vand.u32 %v358, 2147483648
        %v371 = vor.u32 1.1754944e-38, %v370
        %v372 = vsel %vm369, %v371, %v367
        %v373 = vmul.f32 %v348, %v372
        %v374 = vmin.f32 %v373, 1.0
        %v375 = vmax.f32 %v374, -1.0
        %v376 = vmul.f32 %v294, %v294
        %v377 = vmin.f32 16.0, %v376
        %v378 = vmul.f32 %v377, 2.1237322e-06
        %v379 = vadd.f32 %v378, 0.00028619796
        %v380 = vmul.f32 %v377, %v379
        %v381 = vadd.f32 %v380, 0.0036580483
        %v382 = vmul.f32 %v377, %v381
        %v383 = vadd.f32 %v382, 0.05243302
        %v384 = vmul.f32 %v377, %v383
        %v385 = vadd.f32 %v384, 0.18741608
        %v386 = vmul.f32 %v377, %v385
        %v387 = vadd.f32 %v386, 1.1283791
        %v388 = vmul.f32 %v294, %v387
        %v389 = vmul.f32 %v377, 3.8918573e-05
        %v390 = vadd.f32 %v389, 0.001143296
        %v391 = vmul.f32 %v377, %v390
        %v392 = vadd.f32 %v391, 0.014752088
        %v393 = vmul.f32 %v377, %v392
        %v394 = vadd.f32 %v393, 0.112945676
        %v395 = vmul.f32 %v377, %v394
        %v396 = vadd.f32 %v395, 0.4994258
        %v397 = vmul.f32 %v377, %v396
        %v398 = vadd.f32 %v397, 1.0
        %v399 = vrcp.pop %v398
        %v400 = vmul.f32 %v398, %v399
        %v401 = vsub.f32 1.0, %v400
        %v402 = vmul.f32 %v399, %v401
        %v403 = vadd.f32 %v399, %v402
        %vm404 = vweird.f32 %v398
        %vm405 = vweird.f32 %v399
        %vm406 = vmor %vm404, %vm405
        %v407 = vsel %vm406, %v399, %v403
        %v408 = vand.u32 2147483647, %v398
        %vm409 = vcmp.eq.f32.partialorder %v408, 8.507059e+37
        %v410 = vand.u32 %v398, 2147483648
        %v411 = vor.u32 1.1754944e-38, %v410
        %v412 = vsel %vm409, %v411, %v407
        %v413 = vmul.f32 %v388, %v412
        %v414 = vmin.f32 %v413, 1.0
        %v415 = vmax.f32 %v414, -1.0
        %v416 = vmul.f32 %v295, %v295
        %v417 = vmin.f32 16.0, %v416
        %v418 = vmul.f32 %v417, 2.1237322e-06
        %v419 = vadd.f32 %v418, 0.00028619796
        %v420 = vmul.f32 %v417, %v419
        %v421 = vadd.f32 %v420, 0.0036580483
        %v422 = vmul.f32 %v417, %v421
        %v423 = vadd.f32 %v422, 0.05243302
        %v424 = vmul.f32 %v417, %v423
        %v425 = vadd.f32 %v424, 0.18741608
        %v426 = vmul.f32 %v417, %v425
        %v427 = vadd.f32 %v426, 1.1283791
        %v428 = vmul.f32 %v295, %v427
        %v429 = vmul.f32 %v417, 3.8918573e-05
        %v430 = vadd.f32 %v429, 0.001143296
        %v431 = vmul.f32 %v417, %v430
        %v432 = vadd.f32 %v431, 0.014752088
        %v433 = vmul.f32 %v417, %v432
        %v434 = vadd.f32 %v433, 0.112945676
        %v435 = vmul.f32 %v417, %v434
        %v436 = vadd.f32 %v435, 0.4994258
        %v437 = vmul.f32 %v417, %v436
        %v438 = vadd.f32 %v437, 1.0
        %v439 = vrcp.pop %v438
        %v440 = vmul.f32 %v438, %v439
        %v441 = vsub.f32 1.0, %v440
        %v442 = vmul.f32 %v439, %v441
        %v443 = vadd.f32 %v439, %v442
        %vm444 = vweird.f32 %v438
        %vm445 = vweird.f32 %v439
        %vm446 = vmor %vm444, %vm445
        %v447 = vsel %vm446, %v439, %v443
        %v448 = vand.u32 2147483647, %v438
        %vm449 = vcmp.eq.f32.partialorder %v448, 8.507059e+37
        %v450 = vand.u32 %v438, 2147483648
        %v451 = vor.u32 1.1754944e-38, %v450
        %v452 = vsel %vm449, %v451, %v447
        %v453 = vmul.f32 %v428, %v452
        %v454 = vmin.f32 %v453, 1.0
        %v455 = vmax.f32 %v454, -1.0
        %v456 = vadd.f32 %v335, 1.0
        %v457 = vadd.f32 %v375, 1.0
        %v458 = vadd.f32 %v415, 1.0
        %v459 = vadd.f32 %v455, 1.0
        %v460 = vmul.f32 %v288, %v456
        %v461 = vmul.f32 %v289, %v457
        %v462 = vmul.f32 %v290, %v458
        %v463 = vmul.f32 %v291, %v459
        %v464 = vld [vmem:[%s2] sm:$0xff]
        %v465 = vld [vmem:[%s2 + $0x8] sm:$0xff]
        %v466 = vld [vmem:[%s2 + $0x10] sm:$0xff]
        %v467 = vld [vmem:[%s2 + $0x18] sm:$0xff]
        %v468 = vld [vmem:[%s2 + $0x20] sm:$0xff]
        %v469 = vld [vmem:[%s2 + $0x28] sm:$0xff]
        %v470 = vld [vmem:[%s2 + $0x30] sm:$0xff]
        %v471 = vld [vmem:[%s2 + $0x38] sm:$0xff]
        %vm472 = vcmask 130048
        %v474 = vsel %vm472, %v464, 0
        %v477 = vsel %vm472, %v465, 0
        %v480 = vsel %vm472, %v466, 0
        %v483 = vsel %vm472, %v467, 0
        %v486 = vsel %vm472, %v468, 0
        %v489 = vsel %vm472, %v469, 0
        %v492 = vsel %vm472, %v470, 0
        %v495 = vsel %vm472, %v471, 0
        %497 = vmatpush.msra.mxu0 0.0
        %498 = vmatpush.msra.mxu0 0.0
        %499 = vmatpush.msra.mxu0 0.0
        %500 = vmatpush.msra.mxu0 0.0
        %501 = vmatpush.msra.mxu0 0.0
        %502 = vmatpush.msra.mxu0 0.0
        %503 = vmatpush.msra.mxu0 0.0
        %504 = vmatpush.msra.mxu0 0.0
        %505 = vmatpush.msra.mxu0 0.0
        %506 = vmatpush.msra.mxu0 0.0
        %507 = vmatpush.msra.mxu0 0.0
        %508 = vmatpush.msra.mxu0 0.0
        %509 = vmatpush.msra.mxu0 0.0
        %510 = vmatpush.msra.mxu0 0.0
        %511 = vmatpush.msra.mxu0 %v462
        %512 = vmatpush.msra.mxu0 %v460
        %513 = vmatmul.f32.gmra.mxu0 %v474
        %v514 = vpop.f32.mrf.mxu0
        %v515 = vadd.f32 0.0, %v514
        %516 = vmatmul.f32.gmra.mxu0 %v477
        %v517 = vpop.f32.mrf.mxu0
        %v518 = vadd.f32 0.0, %v517
        %519 = vmatmul.f32.gmra.mxu0 %v480
        %v520 = vpop.f32.mrf.mxu0
        %v521 = vadd.f32 0.0, %v520
        %522 = vmatmul.f32.gmra.mxu0 %v483
        %v523 = vpop.f32.mrf.mxu0
        %v524 = vadd.f32 0.0, %v523
        %525 = vmatmul.f32.gmra.mxu0 %v486
        %v526 = vpop.f32.mrf.mxu0
        %v527 = vadd.f32 0.0, %v526
        %528 = vmatmul.f32.gmra.mxu0 %v489
        %v529 = vpop.f32.mrf.mxu0
        %v530 = vadd.f32 0.0, %v529
        %531 = vmatmul.f32.gmra.mxu0 %v492
        %v532 = vpop.f32.mrf.mxu0
        %v533 = vadd.f32 0.0, %v532
        %534 = vmatmul.f32.gmra.mxu0 %v495
        %v535 = vpop.f32.mrf.mxu0
        %v536 = vadd.f32 0.0, %v535
        %537 = vdwg.mxu0
        %538 = vmatpush.msra.mxu0 0.0
        %539 = vmatpush.msra.mxu0 0.0
        %540 = vmatpush.msra.mxu0 0.0
        %541 = vmatpush.msra.mxu0 0.0
        %542 = vmatpush.msra.mxu0 0.0
        %543 = vmatpush.msra.mxu0 0.0
        %544 = vmatpush.msra.mxu0 0.0
        %545 = vmatpush.msra.mxu0 0.0
        %546 = vmatpush.msra.mxu0 0.0
        %547 = vmatpush.msra.mxu0 0.0
        %548 = vmatpush.msra.mxu0 0.0
        %549 = vmatpush.msra.mxu0 0.0
        %550 = vmatpush.msra.mxu0 0.0
        %551 = vmatpush.msra.mxu0 0.0
        %552 = vmatpush.msra.mxu0 %v463
        %553 = vmatpush.msra.mxu0 %v461
        %554 = vmatmul.f32.gmra.mxu0 %v474
        %v555 = vpop.f32.mrf.mxu0
        %v556 = vadd.f32 0.0, %v555
        %557 = vmatmul.f32.gmra.mxu0 %v477
        %v558 = vpop.f32.mrf.mxu0
        %v559 = vadd.f32 0.0, %v558
        %560 = vmatmul.f32.gmra.mxu0 %v480
        %v561 = vpop.f32.mrf.mxu0
        %v562 = vadd.f32 0.0, %v561
        %563 = vmatmul.f32.gmra.mxu0 %v483
        %v564 = vpop.f32.mrf.mxu0
        %v565 = vadd.f32 0.0, %v564
        %566 = vmatmul.f32.gmra.mxu0 %v486
        %v567 = vpop.f32.mrf.mxu0
        %v568 = vadd.f32 0.0, %v567
        %569 = vmatmul.f32.gmra.mxu0 %v489
        %v570 = vpop.f32.mrf.mxu0
        %v571 = vadd.f32 0.0, %v570
        %572 = vmatmul.f32.gmra.mxu0 %v492
        %v573 = vpop.f32.mrf.mxu0
        %v574 = vadd.f32 0.0, %v573
        %575 = vmatmul.f32.gmra.mxu0 %v495
        %v576 = vpop.f32.mrf.mxu0
        %v577 = vadd.f32 0.0, %v576
        %578 = vdwg.mxu0
        %s579 = scalar_lea.vmem %s1, 16
        %v580 = vld [vmem:[%s579] sm:$0xff]
        %v581 = vld [vmem:[%s579 + $0x8] sm:$0xff]
        %v583 = vsel %vm235, %v580, 0
        %v586 = vsel %vm235, %v581, 0
        %588 = vmatpush.msra.mxu0 0.0
        %589 = vmatpush.msra.mxu0 0.0
        %590 = vmatpush.msra.mxu0 0.0
        %591 = vmatpush.msra.mxu0 0.0
        %592 = vmatpush.msra.mxu0 0.0
        %593 = vmatpush.msra.mxu0 0.0
        %594 = vmatpush.msra.mxu0 0.0
        %595 = vmatpush.msra.mxu0 0.0
        %596 = vmatpush.msra.mxu0 %v536
        %597 = vmatpush.msra.mxu0 %v533
        %598 = vmatpush.msra.mxu0 %v530
        %599 = vmatpush.msra.mxu0 %v527
        %600 = vmatpush.msra.mxu0 %v524
        %601 = vmatpush.msra.mxu0 %v521
        %602 = vmatpush.msra.mxu0 %v518
        %603 = vmatpush.msra.mxu0 %v515
        %604 = vmatmul.f32.gmra.mxu0 %v583
        %v605 = vpop.f32.mrf.mxu0
        %v606 = vadd.f32 0.0, %v605
        %607 = vmatmul.f32.gmra.mxu0 %v586
        %v608 = vpop.f32.mrf.mxu0
        %v609 = vadd.f32 0.0, %v608
        %610 = vdwg.mxu0
        %611 = vmatpush.msra.mxu0 0.0
        %612 = vmatpush.msra.mxu0 0.0
        %613 = vmatpush.msra.mxu0 0.0
        %614 = vmatpush.msra.mxu0 0.0
        %615 = vmatpush.msra.mxu0 0.0
        %616 = vmatpush.msra.mxu0 0.0
        %617 = vmatpush.msra.mxu0 0.0
        %618 = vmatpush.msra.mxu0 0.0
        %619 = vmatpush.msra.mxu0 %v577
        %620 = vmatpush.msra.mxu0 %v574
        %621 = vmatpush.msra.mxu0 %v571
        %622 = vmatpush.msra.mxu0 %v568
        %623 = vmatpush.msra.mxu0 %v565
        %624 = vmatpush.msra.mxu0 %v562
        %625 = vmatpush.msra.mxu0 %v559
        %626 = vmatpush.msra.mxu0 %v556
        %627 = vmatmul.f32.gmra.mxu0 %v583
        %v628 = vpop.f32.mrf.mxu0
        %v629 = vadd.f32 0.0, %v628
        %630 = vmatmul.f32.gmra.mxu0 %v586
        %v631 = vpop.f32.mrf.mxu0
        %v632 = vadd.f32 0.0, %v631
        %633 = vdwg.mxu0
        %v634 = vmul.f32 %v606, 0.5
        %v635 = vmul.f32 %v629, 0.5
        %v636 = vmul.f32 %v609, 0.5
        %v637 = vmul.f32 %v632, 0.5
        %v638 = vmul.f32 %v606, 0.70710677
        %v639 = vmul.f32 %v629, 0.70710677
        %v640 = vmul.f32 %v609, 0.70710677
        %v641 = vmul.f32 %v632, 0.70710677
        %v642 = vmul.f32 %v638, %v638
        %v643 = vmin.f32 16.0, %v642
        %v644 = vmul.f32 %v643, 2.1237322e-06
        %v645 = vadd.f32 %v644, 0.00028619796
        %v646 = vmul.f32 %v643, %v645
        %v647 = vadd.f32 %v646, 0.0036580483
        %v648 = vmul.f32 %v643, %v647
        %v649 = vadd.f32 %v648, 0.05243302
        %v650 = vmul.f32 %v643, %v649
        %v651 = vadd.f32 %v650, 0.18741608
        %v652 = vmul.f32 %v643, %v651
        %v653 = vadd.f32 %v652, 1.1283791
        %v654 = vmul.f32 %v638, %v653
        %v655 = vmul.f32 %v643, 3.8918573e-05
        %v656 = vadd.f32 %v655, 0.001143296
        %v657 = vmul.f32 %v643, %v656
        %v658 = vadd.f32 %v657, 0.014752088
        %v659 = vmul.f32 %v643, %v658
        %v660 = vadd.f32 %v659, 0.112945676
        %v661 = vmul.f32 %v643, %v660
        %v662 = vadd.f32 %v661, 0.4994258
        %v663 = vmul.f32 %v643, %v662
        %v664 = vadd.f32 %v663, 1.0
        %v665 = vrcp.pop %v664
        %v666 = vmul.f32 %v664, %v665
        %v667 = vsub.f32 1.0, %v666
        %v668 = vmul.f32 %v665, %v667
        %v669 = vadd.f32 %v665, %v668
        %vm670 = vweird.f32 %v664
        %vm671 = vweird.f32 %v665
        %vm672 = vmor %vm670, %vm671
        %v673 = vsel %vm672, %v665, %v669
        %v674 = vand.u32 2147483647, %v664
        %vm675 = vcmp.eq.f32.partialorder %v674, 8.507059e+37
        %v676 = vand.u32 %v664, 2147483648
        %v677 = vor.u32 1.1754944e-38, %v676
        %v678 = vsel %vm675, %v677, %v673
        %v679 = vmul.f32 %v654, %v678
        %v680 = vmin.f32 %v679, 1.0
        %v681 = vmax.f32 %v680, -1.0
        %v682 = vmul.f32 %v639, %v639
        %v683 = vmin.f32 16.0, %v682
        %v684 = vmul.f32 %v683, 2.1237322e-06
        %v685 = vadd.f32 %v684, 0.00028619796
        %v686 = vmul.f32 %v683, %v685
        %v687 = vadd.f32 %v686, 0.0036580483
        %v688 = vmul.f32 %v683, %v687
        %v689 = vadd.f32 %v688, 0.05243302
        %v690 = vmul.f32 %v683, %v689
        %v691 = vadd.f32 %v690, 0.18741608
        %v692 = vmul.f32 %v683, %v691
        %v693 = vadd.f32 %v692, 1.1283791
        %v694 = vmul.f32 %v639, %v693
        %v695 = vmul.f32 %v683, 3.8918573e-05
        %v696 = vadd.f32 %v695, 0.001143296
        %v697 = vmul.f32 %v683, %v696
        %v698 = vadd.f32 %v697, 0.014752088
        %v699 = vmul.f32 %v683, %v698
        %v700 = vadd.f32 %v699, 0.112945676
        %v701 = vmul.f32 %v683, %v700
        %v702 = vadd.f32 %v701, 0.4994258
        %v703 = vmul.f32 %v683, %v702
        %v704 = vadd.f32 %v703, 1.0
        %v705 = vrcp.pop %v704
        %v706 = vmul.f32 %v704, %v705
        %v707 = vsub.f32 1.0, %v706
        %v708 = vmul.f32 %v705, %v707
        %v709 = vadd.f32 %v705, %v708
        %vm710 = vweird.f32 %v704
        %vm711 = vweird.f32 %v705
        %vm712 = vmor %vm710, %vm711
        %v713 = vsel %vm712, %v705, %v709
        %v714 = vand.u32 2147483647, %v704
        %vm715 = vcmp.eq.f32.partialorder %v714, 8.507059e+37
        %v716 = vand.u32 %v704, 2147483648
        %v717 = vor.u32 1.1754944e-38, %v716
        %v718 = vsel %vm715, %v717, %v713
        %v719 = vmul.f32 %v694, %v718
        %v720 = vmin.f32 %v719, 1.0
        %v721 = vmax.f32 %v720, -1.0
        %v722 = vmul.f32 %v640, %v640
        %v723 = vmin.f32 16.0, %v722
        %v724 = vmul.f32 %v723, 2.1237322e-06
        %v725 = vadd.f32 %v724, 0.00028619796
        %v726 = vmul.f32 %v723, %v725
        %v727 = vadd.f32 %v726, 0.0036580483
        %v728 = vmul.f32 %v723, %v727
        %v729 = vadd.f32 %v728, 0.05243302
        %v730 = vmul.f32 %v723, %v729
        %v731 = vadd.f32 %v730, 0.18741608
        %v732 = vmul.f32 %v723, %v731
        %v733 = vadd.f32 %v732, 1.1283791
        %v734 = vmul.f32 %v640, %v733
        %v735 = vmul.f32 %v723, 3.8918573e-05
        %v736 = vadd.f32 %v735, 0.001143296
        %v737 = vmul.f32 %v723, %v736
        %v738 = vadd.f32 %v737, 0.014752088
        %v739 = vmul.f32 %v723, %v738
        %v740 = vadd.f32 %v739, 0.112945676
        %v741 = vmul.f32 %v723, %v740
        %v742 = vadd.f32 %v741, 0.4994258
        %v743 = vmul.f32 %v723, %v742
        %v744 = vadd.f32 %v743, 1.0
        %v745 = vrcp.pop %v744
        %v746 = vmul.f32 %v744, %v745
        %v747 = vsub.f32 1.0, %v746
        %v748 = vmul.f32 %v745, %v747
        %v749 = vadd.f32 %v745, %v748
        %vm750 = vweird.f32 %v744
        %vm751 = vweird.f32 %v745
        %vm752 = vmor %vm750, %vm751
        %v753 = vsel %vm752, %v745, %v749
        %v754 = vand.u32 2147483647, %v744
        %vm755 = vcmp.eq.f32.partialorder %v754, 8.507059e+37
        %v756 = vand.u32 %v744, 2147483648
        %v757 = vor.u32 1.1754944e-38, %v756
        %v758 = vsel %vm755, %v757, %v753
        %v759 = vmul.f32 %v734, %v758
        %v760 = vmin.f32 %v759, 1.0
        %v761 = vmax.f32 %v760, -1.0
        %v762 = vmul.f32 %v641, %v641
        %v763 = vmin.f32 16.0, %v762
        %v764 = vmul.f32 %v763, 2.1237322e-06
        %v765 = vadd.f32 %v764, 0.00028619796
        %v766 = vmul.f32 %v763, %v765
        %v767 = vadd.f32 %v766, 0.0036580483
        %v768 = vmul.f32 %v763, %v767
        %v769 = vadd.f32 %v768, 0.05243302
        %v770 = vmul.f32 %v763, %v769
        %v771 = vadd.f32 %v770, 0.18741608
        %v772 = vmul.f32 %v763, %v771
        %v773 = vadd.f32 %v772, 1.1283791
        %v774 = vmul.f32 %v641, %v773
        %v775 = vmul.f32 %v763, 3.8918573e-05
        %v776 = vadd.f32 %v775, 0.001143296
        %v777 = vmul.f32 %v763, %v776
        %v778 = vadd.f32 %v777, 0.014752088
        %v779 = vmul.f32 %v763, %v778
        %v780 = vadd.f32 %v779, 0.112945676
        %v781 = vmul.f32 %v763, %v780
        %v782 = vadd.f32 %v781, 0.4994258
        %v783 = vmul.f32 %v763, %v782
        %v784 = vadd.f32 %v783, 1.0
        %v785 = vrcp.pop %v784
        %v786 = vmul.f32 %v784, %v785
        %v787 = vsub.f32 1.0, %v786
        %v788 = vmul.f32 %v785, %v787
        %v789 = vadd.f32 %v785, %v788
        %vm790 = vweird.f32 %v784
        %vm791 = vweird.f32 %v785
        %vm792 = vmor %vm790, %vm791
        %v793 = vsel %vm792, %v785, %v789
        %v794 = vand.u32 2147483647, %v784
        %vm795 = vcmp.eq.f32.partialorder %v794, 8.507059e+37
        %v796 = vand.u32 %v784, 2147483648
        %v797 = vor.u32 1.1754944e-38, %v796
        %v798 = vsel %vm795, %v797, %v793
        %v799 = vmul.f32 %v774, %v798
        %v800 = vmin.f32 %v799, 1.0
        %v801 = vmax.f32 %v800, -1.0
        %v802 = vadd.f32 %v681, 1.0
        %v803 = vadd.f32 %v721, 1.0
        %v804 = vadd.f32 %v761, 1.0
        %v805 = vadd.f32 %v801, 1.0
        %v806 = vmul.f32 %v634, %v802
        %v807 = vmul.f32 %v635, %v803
        %v808 = vmul.f32 %v636, %v804
        %v809 = vmul.f32 %v637, %v805
        %s810 = scalar_lea.vmem %s2, 64
        %v811 = vld [vmem:[%s810] sm:$0xff]
        %v812 = vld [vmem:[%s810 + $0x8] sm:$0xff]
        %v813 = vld [vmem:[%s810 + $0x10] sm:$0xff]
        %v814 = vld [vmem:[%s810 + $0x18] sm:$0xff]
        %v815 = vld [vmem:[%s810 + $0x20] sm:$0xff]
        %v816 = vld [vmem:[%s810 + $0x28] sm:$0xff]
        %v817 = vld [vmem:[%s810 + $0x30] sm:$0xff]
        %v818 = vld [vmem:[%s810 + $0x38] sm:$0xff]
        %v820 = vsel %vm472, %v811, 0
        %v823 = vsel %vm472, %v812, 0
        %v826 = vsel %vm472, %v813, 0
        %v829 = vsel %vm472, %v814, 0
        %v832 = vsel %vm472, %v815, 0
        %v835 = vsel %vm472, %v816, 0
        %v838 = vsel %vm472, %v817, 0
        %v841 = vsel %vm472, %v818, 0
        %843 = vmatpush.msra.mxu0 0.0
        %844 = vmatpush.msra.mxu0 0.0
        %845 = vmatpush.msra.mxu0 0.0
        %846 = vmatpush.msra.mxu0 0.0
        %847 = vmatpush.msra.mxu0 0.0
        %848 = vmatpush.msra.mxu0 0.0
        %849 = vmatpush.msra.mxu0 0.0
        %850 = vmatpush.msra.mxu0 0.0
        %851 = vmatpush.msra.mxu0 0.0
        %852 = vmatpush.msra.mxu0 0.0
        %853 = vmatpush.msra.mxu0 0.0
        %854 = vmatpush.msra.mxu0 0.0
        %855 = vmatpush.msra.mxu0 0.0
        %856 = vmatpush.msra.mxu0 0.0
        %857 = vmatpush.msra.mxu0 %v808
        %858 = vmatpush.msra.mxu0 %v806
        %859 = vmatmul.f32.gmra.mxu0 %v820
        %v860 = vpop.f32.mrf.mxu0
        %v861 = vadd.f32 0.0, %v860
        %862 = vmatmul.f32.gmra.mxu0 %v823
        %v863 = vpop.f32.mrf.mxu0
        %v864 = vadd.f32 0.0, %v863
        %865 = vmatmul.f32.gmra.mxu0 %v826
        %v866 = vpop.f32.mrf.mxu0
        %v867 = vadd.f32 0.0, %v866
        %868 = vmatmul.f32.gmra.mxu0 %v829
        %v869 = vpop.f32.mrf.mxu0
        %v870 = vadd.f32 0.0, %v869
        %871 = vmatmul.f32.gmra.mxu0 %v832
        %v872 = vpop.f32.mrf.mxu0
        %v873 = vadd.f32 0.0, %v872
        %874 = vmatmul.f32.gmra.mxu0 %v835
        %v875 = vpop.f32.mrf.mxu0
        %v876 = vadd.f32 0.0, %v875
        %877 = vmatmul.f32.gmra.mxu0 %v838
        %v878 = vpop.f32.mrf.mxu0
        %v879 = vadd.f32 0.0, %v878
        %880 = vmatmul.f32.gmra.mxu0 %v841
        %v881 = vpop.f32.mrf.mxu0
        %v882 = vadd.f32 0.0, %v881
        %883 = vdwg.mxu0
        %884 = vmatpush.msra.mxu0 0.0
        %885 = vmatpush.msra.mxu0 0.0
        %886 = vmatpush.msra.mxu0 0.0
        %887 = vmatpush.msra.mxu0 0.0
        %888 = vmatpush.msra.mxu0 0.0
        %889 = vmatpush.msra.mxu0 0.0
        %890 = vmatpush.msra.mxu0 0.0
        %891 = vmatpush.msra.mxu0 0.0
        %892 = vmatpush.msra.mxu0 0.0
        %893 = vmatpush.msra.mxu0 0.0
        %894 = vmatpush.msra.mxu0 0.0
        %895 = vmatpush.msra.mxu0 0.0
        %896 = vmatpush.msra.mxu0 0.0
        %897 = vmatpush.msra.mxu0 0.0
        %898 = vmatpush.msra.mxu0 %v809
        %899 = vmatpush.msra.mxu0 %v807
        %900 = vmatmul.f32.gmra.mxu0 %v820
        %v901 = vpop.f32.mrf.mxu0
        %v902 = vadd.f32 0.0, %v901
        %903 = vmatmul.f32.gmra.mxu0 %v823
        %v904 = vpop.f32.mrf.mxu0
        %v905 = vadd.f32 0.0, %v904
        %906 = vmatmul.f32.gmra.mxu0 %v826
        %v907 = vpop.f32.mrf.mxu0
        %v908 = vadd.f32 0.0, %v907
        %909 = vmatmul.f32.gmra.mxu0 %v829
        %v910 = vpop.f32.mrf.mxu0
        %v911 = vadd.f32 0.0, %v910
        %912 = vmatmul.f32.gmra.mxu0 %v832
        %v913 = vpop.f32.mrf.mxu0
        %v914 = vadd.f32 0.0, %v913
        %915 = vmatmul.f32.gmra.mxu0 %v835
        %v916 = vpop.f32.mrf.mxu0
        %v917 = vadd.f32 0.0, %v916
        %918 = vmatmul.f32.gmra.mxu0 %v838
        %v919 = vpop.f32.mrf.mxu0
        %v920 = vadd.f32 0.0, %v919
        %921 = vmatmul.f32.gmra.mxu0 %v841
        %v922 = vpop.f32.mrf.mxu0
        %v923 = vadd.f32 0.0, %v922
        %924 = vdwg.mxu0
        %s925 = scalar_lea.vmem %s1, 32
        %v926 = vld [vmem:[%s925] sm:$0xff]
        %v927 = vld [vmem:[%s925 + $0x8] sm:$0xff]
        %v929 = vsel %vm235, %v926, 0
        %v932 = vsel %vm235, %v927, 0
        %934 = vmatpush.msra.mxu0 0.0
        %935 = vmatpush.msra.mxu0 0.0
        %936 = vmatpush.msra.mxu0 0.0
        %937 = vmatpush.msra.mxu0 0.0
        %938 = vmatpush.msra.mxu0 0.0
        %939 = vmatpush.msra.mxu0 0.0
        %940 = vmatpush.msra.mxu0 0.0
        %941 = vmatpush.msra.mxu0 0.0
        %942 = vmatpush.msra.mxu0 %v882
        %943 = vmatpush.msra.mxu0 %v879
        %944 = vmatpush.msra.mxu0 %v876
        %945 = vmatpush.msra.mxu0 %v873
        %946 = vmatpush.msra.mxu0 %v870
        %947 = vmatpush.msra.mxu0 %v867
        %948 = vmatpush.msra.mxu0 %v864
        %949 = vmatpush.msra.mxu0 %v861
        %950 = vmatmul.f32.gmra.mxu0 %v929
        %v951 = vpop.f32.mrf.mxu0
        %v952 = vadd.f32 0.0, %v951
        %953 = vmatmul.f32.gmra.mxu0 %v932
        %v954 = vpop.f32.mrf.mxu0
        %v955 = vadd.f32 0.0, %v954
        %956 = vdwg.mxu0
        %957 = vmatpush.msra.mxu0 0.0
        %958 = vmatpush.msra.mxu0 0.0
        %959 = vmatpush.msra.mxu0 0.0
        %960 = vmatpush.msra.mxu0 0.0
        %961 = vmatpush.msra.mxu0 0.0
        %962 = vmatpush.msra.mxu0 0.0
        %963 = vmatpush.msra.mxu0 0.0
        %964 = vmatpush.msra.mxu0 0.0
        %965 = vmatpush.msra.mxu0 %v923
        %966 = vmatpush.msra.mxu0 %v920
        %967 = vmatpush.msra.mxu0 %v917
        %968 = vmatpush.msra.mxu0 %v914
        %969 = vmatpush.msra.mxu0 %v911
        %970 = vmatpush.msra.mxu0 %v908
        %971 = vmatpush.msra.mxu0 %v905
        %972 = vmatpush.msra.mxu0 %v902
        %973 = vmatmul.f32.gmra.mxu0 %v929
        %v974 = vpop.f32.mrf.mxu0
        %v975 = vadd.f32 0.0, %v974
        %976 = vmatmul.f32.gmra.mxu0 %v932
        %v977 = vpop.f32.mrf.mxu0
        %v978 = vadd.f32 0.0, %v977
        %979 = vdwg.mxu0
        %v980 = vmul.f32 %v952, 0.5
        %v981 = vmul.f32 %v975, 0.5
        %v982 = vmul.f32 %v955, 0.5
        %v983 = vmul.f32 %v978, 0.5
        %v984 = vmul.f32 %v952, 0.70710677
        %v985 = vmul.f32 %v975, 0.70710677
        %v986 = vmul.f32 %v955, 0.70710677
        %v987 = vmul.f32 %v978, 0.70710677
        %v988 = vmul.f32 %v984, %v984
        %v989 = vmin.f32 16.0, %v988
        %v990 = vmul.f32 %v989, 2.1237322e-06
        %v991 = vadd.f32 %v990, 0.00028619796
        %v992 = vmul.f32 %v989, %v991
        %v993 = vadd.f32 %v992, 0.0036580483
        %v994 = vmul.f32 %v989, %v993
        %v995 = vadd.f32 %v994, 0.05243302
        %v996 = vmul.f32 %v989, %v995
        %v997 = vadd.f32 %v996, 0.18741608
        %v998 = vmul.f32 %v989, %v997
        %v999 = vadd.f32 %v998, 1.1283791
        %v1000 = vmul.f32 %v984, %v999
        %v1001 = vmul.f32 %v989, 3.8918573e-05
        %v1002 = vadd.f32 %v1001, 0.001143296
        %v1003 = vmul.f32 %v989, %v1002
        %v1004 = vadd.f32 %v1003, 0.014752088
        %v1005 = vmul.f32 %v989, %v1004
        %v1006 = vadd.f32 %v1005, 0.112945676
        %v1007 = vmul.f32 %v989, %v1006
        %v1008 = vadd.f32 %v1007, 0.4994258
        %v1009 = vmul.f32 %v989, %v1008
        %v1010 = vadd.f32 %v1009, 1.0
        %v1011 = vrcp.pop %v1010
        %v1012 = vmul.f32 %v1010, %v1011
        %v1013 = vsub.f32 1.0, %v1012
        %v1014 = vmul.f32 %v1011, %v1013
        %v1015 = vadd.f32 %v1011, %v1014
        %vm1016 = vweird.f32 %v1010
        %vm1017 = vweird.f32 %v1011
        %vm1018 = vmor %vm1016, %vm1017
        %v1019 = vsel %vm1018, %v1011, %v1015
        %v1020 = vand.u32 2147483647, %v1010
        %vm1021 = vcmp.eq.f32.partialorder %v1020, 8.507059e+37
        %v1022 = vand.u32 %v1010, 2147483648
        %v1023 = vor.u32 1.1754944e-38, %v1022
        %v1024 = vsel %vm1021, %v1023, %v1019
        %v1025 = vmul.f32 %v1000, %v1024
        %v1026 = vmin.f32 %v1025, 1.0
        %v1027 = vmax.f32 %v1026, -1.0
        %v1028 = vmul.f32 %v985, %v985
        %v1029 = vmin.f32 16.0, %v1028
        %v1030 = vmul.f32 %v1029, 2.1237322e-06
        %v1031 = vadd.f32 %v1030, 0.00028619796
        %v1032 = vmul.f32 %v1029, %v1031
        %v1033 = vadd.f32 %v1032, 0.0036580483
        %v1034 = vmul.f32 %v1029, %v1033
        %v1035 = vadd.f32 %v1034, 0.05243302
        %v1036 = vmul.f32 %v1029, %v1035
        %v1037 = vadd.f32 %v1036, 0.18741608
        %v1038 = vmul.f32 %v1029, %v1037
        %v1039 = vadd.f32 %v1038, 1.1283791
        %v1040 = vmul.f32 %v985, %v1039
        %v1041 = vmul.f32 %v1029, 3.8918573e-05
        %v1042 = vadd.f32 %v1041, 0.001143296
        %v1043 = vmul.f32 %v1029, %v1042
        %v1044 = vadd.f32 %v1043, 0.014752088
        %v1045 = vmul.f32 %v1029, %v1044
        %v1046 = vadd.f32 %v1045, 0.112945676
        %v1047 = vmul.f32 %v1029, %v1046
        %v1048 = vadd.f32 %v1047, 0.4994258
        %v1049 = vmul.f32 %v1029, %v1048
        %v1050 = vadd.f32 %v1049, 1.0
        %v1051 = vrcp.pop %v1050
        %v1052 = vmul.f32 %v1050, %v1051
        %v1053 = vsub.f32 1.0, %v1052
        %v1054 = vmul.f32 %v1051, %v1053
        %v1055 = vadd.f32 %v1051, %v1054
        %vm1056 = vweird.f32 %v1050
        %vm1057 = vweird.f32 %v1051
        %vm1058 = vmor %vm1056, %vm1057
        %v1059 = vsel %vm1058, %v1051, %v1055
        %v1060 = vand.u32 2147483647, %v1050
        %vm1061 = vcmp.eq.f32.partialorder %v1060, 8.507059e+37
        %v1062 = vand.u32 %v1050, 2147483648
        %v1063 = vor.u32 1.1754944e-38, %v1062
        %v1064 = vsel %vm1061, %v1063, %v1059
        %v1065 = vmul.f32 %v1040, %v1064
        %v1066 = vmin.f32 %v1065, 1.0
        %v1067 = vmax.f32 %v1066, -1.0
        %v1068 = vmul.f32 %v986, %v986
        %v1069 = vmin.f32 16.0, %v1068
        %v1070 = vmul.f32 %v1069, 2.1237322e-06
        %v1071 = vadd.f32 %v1070, 0.00028619796
        %v1072 = vmul.f32 %v1069, %v1071
        %v1073 = vadd.f32 %v1072, 0.0036580483
        %v1074 = vmul.f32 %v1069, %v1073
        %v1075 = vadd.f32 %v1074, 0.05243302
        %v1076 = vmul.f32 %v1069, %v1075
        %v1077 = vadd.f32 %v1076, 0.18741608
        %v1078 = vmul.f32 %v1069, %v1077
        %v1079 = vadd.f32 %v1078, 1.1283791
        %v1080 = vmul.f32 %v986, %v1079
        %v1081 = vmul.f32 %v1069, 3.8918573e-05
        %v1082 = vadd.f32 %v1081, 0.001143296
        %v1083 = vmul.f32 %v1069, %v1082
        %v1084 = vadd.f32 %v1083, 0.014752088
        %v1085 = vmul.f32 %v1069, %v1084
        %v1086 = vadd.f32 %v1085, 0.112945676
        %v1087 = vmul.f32 %v1069, %v1086
        %v1088 = vadd.f32 %v1087, 0.4994258
        %v1089 = vmul.f32 %v1069, %v1088
        %v1090 = vadd.f32 %v1089, 1.0
        %v1091 = vrcp.pop %v1090
        %v1092 = vmul.f32 %v1090, %v1091
        %v1093 = vsub.f32 1.0, %v1092
        %v1094 = vmul.f32 %v1091, %v1093
        %v1095 = vadd.f32 %v1091, %v1094
        %vm1096 = vweird.f32 %v1090
        %vm1097 = vweird.f32 %v1091
        %vm1098 = vmor %vm1096, %vm1097
        %v1099 = vsel %vm1098, %v1091, %v1095
        %v1100 = vand.u32 2147483647, %v1090
        %vm1101 = vcmp.eq.f32.partialorder %v1100, 8.507059e+37
        %v1102 = vand.u32 %v1090, 2147483648
        %v1103 = vor.u32 1.1754944e-38, %v1102
        %v1104 = vsel %vm1101, %v1103, %v1099
        %v1105 = vmul.f32 %v1080, %v1104
        %v1106 = vmin.f32 %v1105, 1.0
        %v1107 = vmax.f32 %v1106, -1.0
        %v1108 = vmul.f32 %v987, %v987
        %v1109 = vmin.f32 16.0, %v1108
        %v1110 = vmul.f32 %v1109, 2.1237322e-06
        %v1111 = vadd.f32 %v1110, 0.00028619796
        %v1112 = vmul.f32 %v1109, %v1111
        %v1113 = vadd.f32 %v1112, 0.0036580483
        %v1114 = vmul.f32 %v1109, %v1113
        %v1115 = vadd.f32 %v1114, 0.05243302
        %v1116 = vmul.f32 %v1109, %v1115
        %v1117 = vadd.f32 %v1116, 0.18741608
        %v1118 = vmul.f32 %v1109, %v1117
        %v1119 = vadd.f32 %v1118, 1.1283791
        %v1120 = vmul.f32 %v987, %v1119
        %v1121 = vmul.f32 %v1109, 3.8918573e-05
        %v1122 = vadd.f32 %v1121, 0.001143296
        %v1123 = vmul.f32 %v1109, %v1122
        %v1124 = vadd.f32 %v1123, 0.014752088
        %v1125 = vmul.f32 %v1109, %v1124
        %v1126 = vadd.f32 %v1125, 0.112945676
        %v1127 = vmul.f32 %v1109, %v1126
        %v1128 = vadd.f32 %v1127, 0.4994258
        %v1129 = vmul.f32 %v1109, %v1128
        %v1130 = vadd.f32 %v1129, 1.0
        %v1131 = vrcp.pop %v1130
        %v1132 = vmul.f32 %v1130, %v1131
        %v1133 = vsub.f32 1.0, %v1132
        %v1134 = vmul.f32 %v1131, %v1133
        %v1135 = vadd.f32 %v1131, %v1134
        %vm1136 = vweird.f32 %v1130
        %vm1137 = vweird.f32 %v1131
        %vm1138 = vmor %vm1136, %vm1137
        %v1139 = vsel %vm1138, %v1131, %v1135
        %v1140 = vand.u32 2147483647, %v1130
        %vm1141 = vcmp.eq.f32.partialorder %v1140, 8.507059e+37
        %v1142 = vand.u32 %v1130, 2147483648
        %v1143 = vor.u32 1.1754944e-38, %v1142
        %v1144 = vsel %vm1141, %v1143, %v1139
        %v1145 = vmul.f32 %v1120, %v1144
        %v1146 = vmin.f32 %v1145, 1.0
        %v1147 = vmax.f32 %v1146, -1.0
        %v1148 = vadd.f32 %v1027, 1.0
        %v1149 = vadd.f32 %v1067, 1.0
        %v1150 = vadd.f32 %v1107, 1.0
        %v1151 = vadd.f32 %v1147, 1.0
        %v1152 = vmul.f32 %v980, %v1148
        %v1153 = vmul.f32 %v981, %v1149
        %v1154 = vmul.f32 %v982, %v1150
        %v1155 = vmul.f32 %v983, %v1151
        %s1156 = scalar_lea.vmem %s2, 128
        %v1157 = vld [vmem:[%s1156] sm:$0xff]
        %v1158 = vld [vmem:[%s1156 + $0x8] sm:$0xff]
        %v1159 = vld [vmem:[%s1156 + $0x10] sm:$0xff]
        %v1160 = vld [vmem:[%s1156 + $0x18] sm:$0xff]
        %v1161 = vld [vmem:[%s1156 + $0x20] sm:$0xff]
        %v1162 = vld [vmem:[%s1156 + $0x28] sm:$0xff]
        %v1163 = vld [vmem:[%s1156 + $0x30] sm:$0xff]
        %v1164 = vld [vmem:[%s1156 + $0x38] sm:$0xff]
        %v1166 = vsel %vm472, %v1157, 0
        %v1169 = vsel %vm472, %v1158, 0
        %v1172 = vsel %vm472, %v1159, 0
        %v1175 = vsel %vm472, %v1160, 0
        %v1178 = vsel %vm472, %v1161, 0
        %v1181 = vsel %vm472, %v1162, 0
        %v1184 = vsel %vm472, %v1163, 0
        %v1187 = vsel %vm472, %v1164, 0
        %1189 = vmatpush.msra.mxu0 0.0
        %1190 = vmatpush.msra.mxu0 0.0
        %1191 = vmatpush.msra.mxu0 0.0
        %1192 = vmatpush.msra.mxu0 0.0
        %1193 = vmatpush.msra.mxu0 0.0
        %1194 = vmatpush.msra.mxu0 0.0
        %1195 = vmatpush.msra.mxu0 0.0
        %1196 = vmatpush.msra.mxu0 0.0
        %1197 = vmatpush.msra.mxu0 0.0
        %1198 = vmatpush.msra.mxu0 0.0
        %1199 = vmatpush.msra.mxu0 0.0
        %1200 = vmatpush.msra.mxu0 0.0
        %1201 = vmatpush.msra.mxu0 0.0
        %1202 = vmatpush.msra.mxu0 0.0
        %1203 = vmatpush.msra.mxu0 %v1154
        %1204 = vmatpush.msra.mxu0 %v1152
        %1205 = vmatmul.f32.gmra.mxu0 %v1166
        %v1206 = vpop.f32.mrf.mxu0
        %v1207 = vadd.f32 0.0, %v1206
        %1208 = vmatmul.f32.gmra.mxu0 %v1169
        %v1209 = vpop.f32.mrf.mxu0
        %v1210 = vadd.f32 0.0, %v1209
        %1211 = vmatmul.f32.gmra.mxu0 %v1172
        %v1212 = vpop.f32.mrf.mxu0
        %v1213 = vadd.f32 0.0, %v1212
        %1214 = vmatmul.f32.gmra.mxu0 %v1175
        %v1215 = vpop.f32.mrf.mxu0
        %v1216 = vadd.f32 0.0, %v1215
        %1217 = vmatmul.f32.gmra.mxu0 %v1178
        %v1218 = vpop.f32.mrf.mxu0
        %v1219 = vadd.f32 0.0, %v1218
        %1220 = vmatmul.f32.gmra.mxu0 %v1181
        %v1221 = vpop.f32.mrf.mxu0
        %v1222 = vadd.f32 0.0, %v1221
        %1223 = vmatmul.f32.gmra.mxu0 %v1184
        %v1224 = vpop.f32.mrf.mxu0
        %v1225 = vadd.f32 0.0, %v1224
        %1226 = vmatmul.f32.gmra.mxu0 %v1187
        %v1227 = vpop.f32.mrf.mxu0
        %v1228 = vadd.f32 0.0, %v1227
        %1229 = vdwg.mxu0
        %1230 = vmatpush.msra.mxu0 0.0
        %1231 = vmatpush.msra.mxu0 0.0
        %1232 = vmatpush.msra.mxu0 0.0
        %1233 = vmatpush.msra.mxu0 0.0
        %1234 = vmatpush.msra.mxu0 0.0
        %1235 = vmatpush.msra.mxu0 0.0
        %1236 = vmatpush.msra.mxu0 0.0
        %1237 = vmatpush.msra.mxu0 0.0
        %1238 = vmatpush.msra.mxu0 0.0
        %1239 = vmatpush.msra.mxu0 0.0
        %1240 = vmatpush.msra.mxu0 0.0
        %1241 = vmatpush.msra.mxu0 0.0
        %1242 = vmatpush.msra.mxu0 0.0
        %1243 = vmatpush.msra.mxu0 0.0
        %1244 = vmatpush.msra.mxu0 %v1155
        %1245 = vmatpush.msra.mxu0 %v1153
        %1246 = vmatmul.f32.gmra.mxu0 %v1166
        %v1247 = vpop.f32.mrf.mxu0
        %v1248 = vadd.f32 0.0, %v1247
        %1249 = vmatmul.f32.gmra.mxu0 %v1169
        %v1250 = vpop.f32.mrf.mxu0
        %v1251 = vadd.f32 0.0, %v1250
        %1252 = vmatmul.f32.gmra.mxu0 %v1172
        %v1253 = vpop.f32.mrf.mxu0
        %v1254 = vadd.f32 0.0, %v1253
        %1255 = vmatmul.f32.gmra.mxu0 %v1175
        %v1256 = vpop.f32.mrf.mxu0
        %v1257 = vadd.f32 0.0, %v1256
        %1258 = vmatmul.f32.gmra.mxu0 %v1178
        %v1259 = vpop.f32.mrf.mxu0
        %v1260 = vadd.f32 0.0, %v1259
        %1261 = vmatmul.f32.gmra.mxu0 %v1181
        %v1262 = vpop.f32.mrf.mxu0
        %v1263 = vadd.f32 0.0, %v1262
        %1264 = vmatmul.f32.gmra.mxu0 %v1184
        %v1265 = vpop.f32.mrf.mxu0
        %v1266 = vadd.f32 0.0, %v1265
        %1267 = vmatmul.f32.gmra.mxu0 %v1187
        %v1268 = vpop.f32.mrf.mxu0
        %v1269 = vadd.f32 0.0, %v1268
        %1270 = vdwg.mxu0
        %s1271 = scalar_lea.vmem %s1, 48
        %v1272 = vld [vmem:[%s1271] sm:$0xff]
        %v1273 = vld [vmem:[%s1271 + $0x8] sm:$0xff]
        %v1275 = vsel %vm235, %v1272, 0
        %v1278 = vsel %vm235, %v1273, 0
        %1280 = vmatpush.msra.mxu0 0.0
        %1281 = vmatpush.msra.mxu0 0.0
        %1282 = vmatpush.msra.mxu0 0.0
        %1283 = vmatpush.msra.mxu0 0.0
        %1284 = vmatpush.msra.mxu0 0.0
        %1285 = vmatpush.msra.mxu0 0.0
        %1286 = vmatpush.msra.mxu0 0.0
        %1287 = vmatpush.msra.mxu0 0.0
        %1288 = vmatpush.msra.mxu0 %v1228
        %1289 = vmatpush.msra.mxu0 %v1225
        %1290 = vmatpush.msra.mxu0 %v1222
        %1291 = vmatpush.msra.mxu0 %v1219
        %1292 = vmatpush.msra.mxu0 %v1216
        %1293 = vmatpush.msra.mxu0 %v1213
        %1294 = vmatpush.msra.mxu0 %v1210
        %1295 = vmatpush.msra.mxu0 %v1207
        %1296 = vmatmul.f32.gmra.mxu0 %v1275
        %v1297 = vpop.f32.mrf.mxu0
        %v1298 = vadd.f32 0.0, %v1297
        %1299 = vmatmul.f32.gmra.mxu0 %v1278
        %v1300 = vpop.f32.mrf.mxu0
        %v1301 = vadd.f32 0.0, %v1300
        %1302 = vdwg.mxu0
        %1303 = vmatpush.msra.mxu0 0.0
        %1304 = vmatpush.msra.mxu0 0.0
        %1305 = vmatpush.msra.mxu0 0.0
        %1306 = vmatpush.msra.mxu0 0.0
        %1307 = vmatpush.msra.mxu0 0.0
        %1308 = vmatpush.msra.mxu0 0.0
        %1309 = vmatpush.msra.mxu0 0.0
        %1310 = vmatpush.msra.mxu0 0.0
        %1311 = vmatpush.msra.mxu0 %v1269
        %1312 = vmatpush.msra.mxu0 %v1266
        %1313 = vmatpush.msra.mxu0 %v1263
        %1314 = vmatpush.msra.mxu0 %v1260
        %1315 = vmatpush.msra.mxu0 %v1257
        %1316 = vmatpush.msra.mxu0 %v1254
        %1317 = vmatpush.msra.mxu0 %v1251
        %1318 = vmatpush.msra.mxu0 %v1248
        %1319 = vmatmul.f32.gmra.mxu0 %v1275
        %v1320 = vpop.f32.mrf.mxu0
        %v1321 = vadd.f32 0.0, %v1320
        %1322 = vmatmul.f32.gmra.mxu0 %v1278
        %v1323 = vpop.f32.mrf.mxu0
        %v1324 = vadd.f32 0.0, %v1323
        %1325 = vdwg.mxu0
        %v1326 = vmul.f32 %v1298, 0.5
        %v1327 = vmul.f32 %v1321, 0.5
        %v1328 = vmul.f32 %v1301, 0.5
        %v1329 = vmul.f32 %v1324, 0.5
        %v1330 = vmul.f32 %v1298, 0.70710677
        %v1331 = vmul.f32 %v1321, 0.70710677
        %v1332 = vmul.f32 %v1301, 0.70710677
        %v1333 = vmul.f32 %v1324, 0.70710677
        %v1334 = vmul.f32 %v1330, %v1330
        %v1335 = vmin.f32 16.0, %v1334
        %v1336 = vmul.f32 %v1335, 2.1237322e-06
        %v1337 = vadd.f32 %v1336, 0.00028619796
        %v1338 = vmul.f32 %v1335, %v1337
        %v1339 = vadd.f32 %v1338, 0.0036580483
        %v1340 = vmul.f32 %v1335, %v1339
        %v1341 = vadd.f32 %v1340, 0.05243302
        %v1342 = vmul.f32 %v1335, %v1341
        %v1343 = vadd.f32 %v1342, 0.18741608
        %v1344 = vmul.f32 %v1335, %v1343
        %v1345 = vadd.f32 %v1344, 1.1283791
        %v1346 = vmul.f32 %v1330, %v1345
        %v1347 = vmul.f32 %v1335, 3.8918573e-05
        %v1348 = vadd.f32 %v1347, 0.001143296
        %v1349 = vmul.f32 %v1335, %v1348
        %v1350 = vadd.f32 %v1349, 0.014752088
        %v1351 = vmul.f32 %v1335, %v1350
        %v1352 = vadd.f32 %v1351, 0.112945676
        %v1353 = vmul.f32 %v1335, %v1352
        %v1354 = vadd.f32 %v1353, 0.4994258
        %v1355 = vmul.f32 %v1335, %v1354
        %v1356 = vadd.f32 %v1355, 1.0
        %v1357 = vrcp.pop %v1356
        %v1358 = vmul.f32 %v1356, %v1357
        %v1359 = vsub.f32 1.0, %v1358
        %v1360 = vmul.f32 %v1357, %v1359
        %v1361 = vadd.f32 %v1357, %v1360
        %vm1362 = vweird.f32 %v1356
        %vm1363 = vweird.f32 %v1357
        %vm1364 = vmor %vm1362, %vm1363
        %v1365 = vsel %vm1364, %v1357, %v1361
        %v1366 = vand.u32 2147483647, %v1356
        %vm1367 = vcmp.eq.f32.partialorder %v1366, 8.507059e+37
        %v1368 = vand.u32 %v1356, 2147483648
        %v1369 = vor.u32 1.1754944e-38, %v1368
        %v1370 = vsel %vm1367, %v1369, %v1365
        %v1371 = vmul.f32 %v1346, %v1370
        %v1372 = vmin.f32 %v1371, 1.0
        %v1373 = vmax.f32 %v1372, -1.0
        %v1374 = vmul.f32 %v1331, %v1331
        %v1375 = vmin.f32 16.0, %v1374
        %v1376 = vmul.f32 %v1375, 2.1237322e-06
        %v1377 = vadd.f32 %v1376, 0.00028619796
        %v1378 = vmul.f32 %v1375, %v1377
        %v1379 = vadd.f32 %v1378, 0.0036580483
        %v1380 = vmul.f32 %v1375, %v1379
        %v1381 = vadd.f32 %v1380, 0.05243302
        %v1382 = vmul.f32 %v1375, %v1381
        %v1383 = vadd.f32 %v1382, 0.18741608
        %v1384 = vmul.f32 %v1375, %v1383
        %v1385 = vadd.f32 %v1384, 1.1283791
        %v1386 = vmul.f32 %v1331, %v1385
        %v1387 = vmul.f32 %v1375, 3.8918573e-05
        %v1388 = vadd.f32 %v1387, 0.001143296
        %v1389 = vmul.f32 %v1375, %v1388
        %v1390 = vadd.f32 %v1389, 0.014752088
        %v1391 = vmul.f32 %v1375, %v1390
        %v1392 = vadd.f32 %v1391, 0.112945676
        %v1393 = vmul.f32 %v1375, %v1392
        %v1394 = vadd.f32 %v1393, 0.4994258
        %v1395 = vmul.f32 %v1375, %v1394
        %v1396 = vadd.f32 %v1395, 1.0
        %v1397 = vrcp.pop %v1396
        %v1398 = vmul.f32 %v1396, %v1397
        %v1399 = vsub.f32 1.0, %v1398
        %v1400 = vmul.f32 %v1397, %v1399
        %v1401 = vadd.f32 %v1397, %v1400
        %vm1402 = vweird.f32 %v1396
        %vm1403 = vweird.f32 %v1397
        %vm1404 = vmor %vm1402, %vm1403
        %v1405 = vsel %vm1404, %v1397, %v1401
        %v1406 = vand.u32 2147483647, %v1396
        %vm1407 = vcmp.eq.f32.partialorder %v1406, 8.507059e+37
        %v1408 = vand.u32 %v1396, 2147483648
        %v1409 = vor.u32 1.1754944e-38, %v1408
        %v1410 = vsel %vm1407, %v1409, %v1405
        %v1411 = vmul.f32 %v1386, %v1410
        %v1412 = vmin.f32 %v1411, 1.0
        %v1413 = vmax.f32 %v1412, -1.0
        %v1414 = vmul.f32 %v1332, %v1332
        %v1415 = vmin.f32 16.0, %v1414
        %v1416 = vmul.f32 %v1415, 2.1237322e-06
        %v1417 = vadd.f32 %v1416, 0.00028619796
        %v1418 = vmul.f32 %v1415, %v1417
        %v1419 = vadd.f32 %v1418, 0.0036580483
        %v1420 = vmul.f32 %v1415, %v1419
        %v1421 = vadd.f32 %v1420, 0.05243302
        %v1422 = vmul.f32 %v1415, %v1421
        %v1423 = vadd.f32 %v1422, 0.18741608
        %v1424 = vmul.f32 %v1415, %v1423
        %v1425 = vadd.f32 %v1424, 1.1283791
        %v1426 = vmul.f32 %v1332, %v1425
        %v1427 = vmul.f32 %v1415, 3.8918573e-05
        %v1428 = vadd.f32 %v1427, 0.001143296
        %v1429 = vmul.f32 %v1415, %v1428
        %v1430 = vadd.f32 %v1429, 0.014752088
        %v1431 = vmul.f32 %v1415, %v1430
        %v1432 = vadd.f32 %v1431, 0.112945676
        %v1433 = vmul.f32 %v1415, %v1432
        %v1434 = vadd.f32 %v1433, 0.4994258
        %v1435 = vmul.f32 %v1415, %v1434
        %v1436 = vadd.f32 %v1435, 1.0
        %v1437 = vrcp.pop %v1436
        %v1438 = vmul.f32 %v1436, %v1437
        %v1439 = vsub.f32 1.0, %v1438
        %v1440 = vmul.f32 %v1437, %v1439
        %v1441 = vadd.f32 %v1437, %v1440
        %vm1442 = vweird.f32 %v1436
        %vm1443 = vweird.f32 %v1437
        %vm1444 = vmor %vm1442, %vm1443
        %v1445 = vsel %vm1444, %v1437, %v1441
        %v1446 = vand.u32 2147483647, %v1436
        %vm1447 = vcmp.eq.f32.partialorder %v1446, 8.507059e+37
        %v1448 = vand.u32 %v1436, 2147483648
        %v1449 = vor.u32 1.1754944e-38, %v1448
        %v1450 = vsel %vm1447, %v1449, %v1445
        %v1451 = vmul.f32 %v1426, %v1450
        %v1452 = vmin.f32 %v1451, 1.0
        %v1453 = vmax.f32 %v1452, -1.0
        %v1454 = vmul.f32 %v1333, %v1333
        %v1455 = vmin.f32 16.0, %v1454
        %v1456 = vmul.f32 %v1455, 2.1237322e-06
        %v1457 = vadd.f32 %v1456, 0.00028619796
        %v1458 = vmul.f32 %v1455, %v1457
        %v1459 = vadd.f32 %v1458, 0.0036580483
        %v1460 = vmul.f32 %v1455, %v1459
        %v1461 = vadd.f32 %v1460, 0.05243302
        %v1462 = vmul.f32 %v1455, %v1461
        %v1463 = vadd.f32 %v1462, 0.18741608
        %v1464 = vmul.f32 %v1455, %v1463
        %v1465 = vadd.f32 %v1464, 1.1283791
        %v1466 = vmul.f32 %v1333, %v1465
        %v1467 = vmul.f32 %v1455, 3.8918573e-05
        %v1468 = vadd.f32 %v1467, 0.001143296
        %v1469 = vmul.f32 %v1455, %v1468
        %v1470 = vadd.f32 %v1469, 0.014752088
        %v1471 = vmul.f32 %v1455, %v1470
        %v1472 = vadd.f32 %v1471, 0.112945676
        %v1473 = vmul.f32 %v1455, %v1472
        %v1474 = vadd.f32 %v1473, 0.4994258
        %v1475 = vmul.f32 %v1455, %v1474
        %v1476 = vadd.f32 %v1475, 1.0
        %v1477 = vrcp.pop %v1476
        %v1478 = vmul.f32 %v1476, %v1477
        %v1479 = vsub.f32 1.0, %v1478
        %v1480 = vmul.f32 %v1477, %v1479
        %v1481 = vadd.f32 %v1477, %v1480
        %vm1482 = vweird.f32 %v1476
        %vm1483 = vweird.f32 %v1477
        %vm1484 = vmor %vm1482, %vm1483
        %v1485 = vsel %vm1484, %v1477, %v1481
        %v1486 = vand.u32 2147483647, %v1476
        %vm1487 = vcmp.eq.f32.partialorder %v1486, 8.507059e+37
        %v1488 = vand.u32 %v1476, 2147483648
        %v1489 = vor.u32 1.1754944e-38, %v1488
        %v1490 = vsel %vm1487, %v1489, %v1485
        %v1491 = vmul.f32 %v1466, %v1490
        %v1492 = vmin.f32 %v1491, 1.0
        %v1493 = vmax.f32 %v1492, -1.0
        %v1494 = vadd.f32 %v1373, 1.0
        %v1495 = vadd.f32 %v1413, 1.0
        %v1496 = vadd.f32 %v1453, 1.0
        %v1497 = vadd.f32 %v1493, 1.0
        %v1498 = vmul.f32 %v1326, %v1494
        %v1499 = vmul.f32 %v1327, %v1495
        %v1500 = vmul.f32 %v1328, %v1496
        %v1501 = vmul.f32 %v1329, %v1497
        %s1502 = scalar_lea.vmem %s2, 192
        %v1503 = vld [vmem:[%s1502] sm:$0xff]
        %v1504 = vld [vmem:[%s1502 + $0x8] sm:$0xff]
        %v1505 = vld [vmem:[%s1502 + $0x10] sm:$0xff]
        %v1506 = vld [vmem:[%s1502 + $0x18] sm:$0xff]
        %v1507 = vld [vmem:[%s1502 + $0x20] sm:$0xff]
        %v1508 = vld [vmem:[%s1502 + $0x28] sm:$0xff]
        %v1509 = vld [vmem:[%s1502 + $0x30] sm:$0xff]
        %v1510 = vld [vmem:[%s1502 + $0x38] sm:$0xff]
        %v1512 = vsel %vm472, %v1503, 0
        %v1515 = vsel %vm472, %v1504, 0
        %v1518 = vsel %vm472, %v1505, 0
        %v1521 = vsel %vm472, %v1506, 0
        %v1524 = vsel %vm472, %v1507, 0
        %v1527 = vsel %vm472, %v1508, 0
        %v1530 = vsel %vm472, %v1509, 0
        %v1533 = vsel %vm472, %v1510, 0
        %1535 = vmatpush.msra.mxu0 0.0
        %1536 = vmatpush.msra.mxu0 0.0
        %1537 = vmatpush.msra.mxu0 0.0
        %1538 = vmatpush.msra.mxu0 0.0
        %1539 = vmatpush.msra.mxu0 0.0
        %1540 = vmatpush.msra.mxu0 0.0
        %1541 = vmatpush.msra.mxu0 0.0
        %1542 = vmatpush.msra.mxu0 0.0
        %1543 = vmatpush.msra.mxu0 0.0
        %1544 = vmatpush.msra.mxu0 0.0
        %1545 = vmatpush.msra.mxu0 0.0
        %1546 = vmatpush.msra.mxu0 0.0
        %1547 = vmatpush.msra.mxu0 0.0
        %1548 = vmatpush.msra.mxu0 0.0
        %1549 = vmatpush.msra.mxu0 %v1500
        %1550 = vmatpush.msra.mxu0 %v1498
        %1551 = vmatmul.f32.gmra.mxu0 %v1512
        %v1552 = vpop.f32.mrf.mxu0
        %v1553 = vadd.f32 0.0, %v1552
        %1554 = vmatmul.f32.gmra.mxu0 %v1515
        %v1555 = vpop.f32.mrf.mxu0
        %v1556 = vadd.f32 0.0, %v1555
        %1557 = vmatmul.f32.gmra.mxu0 %v1518
        %v1558 = vpop.f32.mrf.mxu0
        %v1559 = vadd.f32 0.0, %v1558
        %1560 = vmatmul.f32.gmra.mxu0 %v1521
        %v1561 = vpop.f32.mrf.mxu0
        %v1562 = vadd.f32 0.0, %v1561
        %1563 = vmatmul.f32.gmra.mxu0 %v1524
        %v1564 = vpop.f32.mrf.mxu0
        %v1565 = vadd.f32 0.0, %v1564
        %1566 = vmatmul.f32.gmra.mxu0 %v1527
        %v1567 = vpop.f32.mrf.mxu0
        %v1568 = vadd.f32 0.0, %v1567
        %1569 = vmatmul.f32.gmra.mxu0 %v1530
        %v1570 = vpop.f32.mrf.mxu0
        %v1571 = vadd.f32 0.0, %v1570
        %1572 = vmatmul.f32.gmra.mxu0 %v1533
        %v1573 = vpop.f32.mrf.mxu0
        %v1574 = vadd.f32 0.0, %v1573
        %1575 = vdwg.mxu0
        %1576 = vmatpush.msra.mxu0 0.0
        %1577 = vmatpush.msra.mxu0 0.0
        %1578 = vmatpush.msra.mxu0 0.0
        %1579 = vmatpush.msra.mxu0 0.0
        %1580 = vmatpush.msra.mxu0 0.0
        %1581 = vmatpush.msra.mxu0 0.0
        %1582 = vmatpush.msra.mxu0 0.0
        %1583 = vmatpush.msra.mxu0 0.0
        %1584 = vmatpush.msra.mxu0 0.0
        %1585 = vmatpush.msra.mxu0 0.0
        %1586 = vmatpush.msra.mxu0 0.0
        %1587 = vmatpush.msra.mxu0 0.0
        %1588 = vmatpush.msra.mxu0 0.0
        %1589 = vmatpush.msra.mxu0 0.0
        %1590 = vmatpush.msra.mxu0 %v1501
        %1591 = vmatpush.msra.mxu0 %v1499
        %1592 = vmatmul.f32.gmra.mxu0 %v1512
        %v1593 = vpop.f32.mrf.mxu0
        %v1594 = vadd.f32 0.0, %v1593
        %1595 = vmatmul.f32.gmra.mxu0 %v1515
        %v1596 = vpop.f32.mrf.mxu0
        %v1597 = vadd.f32 0.0, %v1596
        %1598 = vmatmul.f32.gmra.mxu0 %v1518
        %v1599 = vpop.f32.mrf.mxu0
        %v1600 = vadd.f32 0.0, %v1599
        %1601 = vmatmul.f32.gmra.mxu0 %v1521
        %v1602 = vpop.f32.mrf.mxu0
        %v1603 = vadd.f32 0.0, %v1602
        %1604 = vmatmul.f32.gmra.mxu0 %v1524
        %v1605 = vpop.f32.mrf.mxu0
        %v1606 = vadd.f32 0.0, %v1605
        %1607 = vmatmul.f32.gmra.mxu0 %v1527
        %v1608 = vpop.f32.mrf.mxu0
        %v1609 = vadd.f32 0.0, %v1608
        %1610 = vmatmul.f32.gmra.mxu0 %v1530
        %v1611 = vpop.f32.mrf.mxu0
        %v1612 = vadd.f32 0.0, %v1611
        %1613 = vmatmul.f32.gmra.mxu0 %v1533
        %v1614 = vpop.f32.mrf.mxu0
        %v1615 = vadd.f32 0.0, %v1614
        %1616 = vdwg.mxu0
        %1617 = vst [vmem:[%s214] sm:$0xff] %v1553
        %1618 = vst [vmem:[%s214 + $0x8] sm:$0xff] %v1594
        %1619 = vst [vmem:[%s214 + $0x10] sm:$0xff] %v1556
        %1620 = vst [vmem:[%s214 + $0x18] sm:$0xff] %v1597
        %1621 = vst [vmem:[%s214 + $0x20] sm:$0xff] %v1559
        %1622 = vst [vmem:[%s214 + $0x28] sm:$0xff] %v1600
        %1623 = vst [vmem:[%s214 + $0x30] sm:$0xff] %v1562
        %1624 = vst [vmem:[%s214 + $0x38] sm:$0xff] %v1603
        %1625 = vst [vmem:[%s214 + $0x40] sm:$0xff] %v1565
        %1626 = vst [vmem:[%s214 + $0x48] sm:$0xff] %v1606
        %1627 = vst [vmem:[%s214 + $0x50] sm:$0xff] %v1568
        %1628 = vst [vmem:[%s214 + $0x58] sm:$0xff] %v1609
        %1629 = vst [vmem:[%s214 + $0x60] sm:$0xff] %v1571
        %1630 = vst [vmem:[%s214 + $0x68] sm:$0xff] %v1612
        %1631 = vst [vmem:[%s214 + $0x70] sm:$0xff] %v1574
        %1632 = vst [vmem:[%s214 + $0x78] sm:$0xff] %v1615
        %s1633 = sand.u32 %s90, 1
        %s1634 = sand.u32 %s90, 1
        %s1635 = smul.addr %s1634, 128
        %s1636 = scalar_lea.vmem [#allocation3], %s1635
        // Predicated region
        $region56: #{four_mlp_forward.1} parent=50 // pred_check
          %p1637 = pneg %p100
        $region57: #{four_mlp_forward.1} parent=50 // pred_check_branch
          %1639 = sbr.rel (%p1637) target = $region59
        $region58: #{four_mlp_forward.1} parent=50 // pred_region
          %s1640 = smul.u32 2, %s14
          %s1641 = smul.addr %s1640, 8
          %s1642 = scalar_lea.vmem %s3, %s1641
          // Predicated region
          $region60: #{four_mlp_forward.1} parent=58 // pred_check
            _
          $region61: #{four_mlp_forward.1} parent=58 // pred_check_branch
            %1644 = sbr.rel (0) target = $region63
          $region62: #{four_mlp_forward.1} parent=58 // pred_region
            // Predicated region
            $region64: #{four_mlp_forward.1} parent=62 // pred_check
              _
            $region65: #{four_mlp_forward.1} parent=62 // pred_check_branch
              %1646 = sbr.rel (0) target = $region67
            $region66: #{four_mlp_forward.1} parent=62 // pred_region
              loop: start=0, step=1, limit=1
              $region68: #{four_mlp_forward.1} parent=66 // loop_pre_header
                _
              $region69: #{four_mlp_forward.1} parent=66 // loop_header
                %s1648 = sphi 0, %s1652
                %p1649 = scmp.ge.s32.totalorder %s1648, 1
                %s1653 = sphi %s1636, %s1636
                %s1654 = sphi %s1642, %s1642
              $region70: #{four_mlp_forward.1} parent=66 // loop_header_branch
                %1651 = sbr.rel (%p1649) target = $region74
              $region71: #{four_mlp_forward.1} parent=66 // loop_body
                %v1655 = vld [vmem:[%s1653] sm:$0xff]
                %1656 = vst [vmem:[%s1654] sm:$0xff] %v1655
                %v1657 = vld [vmem:[%s1653 + $0x8] sm:$0xff]
                %1658 = vst [vmem:[%s1654 + $0x8] sm:$0xff] %v1657
                %v1659 = vld [vmem:[%s1653 + $0x10] sm:$0xff]
                %1660 = vst [vmem:[%s1654 + $0x20] sm:$0xff] %v1659
                %v1661 = vld [vmem:[%s1653 + $0x18] sm:$0xff]
                %1662 = vst [vmem:[%s1654 + $0x28] sm:$0xff] %v1661
                %v1663 = vld [vmem:[%s1653 + $0x20] sm:$0xff]
                %1664 = vst [vmem:[%s1654 + $0x40] sm:$0xff] %v1663
                %v1665 = vld [vmem:[%s1653 + $0x28] sm:$0xff]
                %1666 = vst [vmem:[%s1654 + $0x48] sm:$0xff] %v1665
                %v1667 = vld [vmem:[%s1653 + $0x30] sm:$0xff]
                %1668 = vst [vmem:[%s1654 + $0x60] sm:$0xff] %v1667
                %v1669 = vld [vmem:[%s1653 + $0x38] sm:$0xff]
                %1670 = vst [vmem:[%s1654 + $0x68] sm:$0xff] %v1669
                %v1671 = vld [vmem:[%s1653 + $0x40] sm:$0xff]
                %1672 = vst [vmem:[%s1654 + $0x80] sm:$0xff] %v1671
                %v1673 = vld [vmem:[%s1653 + $0x48] sm:$0xff]
                %1674 = vst [vmem:[%s1654 + $0x88] sm:$0xff] %v1673
                %v1675 = vld [vmem:[%s1653 + $0x50] sm:$0xff]
                %1676 = vst [vmem:[%s1654 + $0xa0] sm:$0xff] %v1675
                %v1677 = vld [vmem:[%s1653 + $0x58] sm:$0xff]
                %1678 = vst [vmem:[%s1654 + $0xa8] sm:$0xff] %v1677
                %v1679 = vld [vmem:[%s1653 + $0x60] sm:$0xff]
                %1680 = vst [vmem:[%s1654 + $0xc0] sm:$0xff] %v1679
                %v1681 = vld [vmem:[%s1653 + $0x68] sm:$0xff]
                %1682 = vst [vmem:[%s1654 + $0xc8] sm:$0xff] %v1681
                %v1683 = vld [vmem:[%s1653 + $0x70] sm:$0xff]
                %1684 = vst [vmem:[%s1654 + $0xe0] sm:$0xff] %v1683
                %v1685 = vld [vmem:[%s1653 + $0x78] sm:$0xff]
                %1686 = vst [vmem:[%s1654 + $0xe8] sm:$0xff] %v1685
              $region72: #{four_mlp_forward.1} parent=66 // loop_footer
                %s1652 = sadd.s32 1, %s1648
              $region73: #{four_mlp_forward.1} parent=66 // loop_footer_branch
                %1647 = sbr.rel target = $region69
              $region74: #{four_mlp_forward.1} parent=66 // loop_exit
                _
            $region67: #{four_mlp_forward.1} parent=62 // pred_fallthru
              _
            // Predicated region
            $region75: #{four_mlp_forward.1} parent=62 // pred_check
              _
            $region76: #{four_mlp_forward.1} parent=62 // pred_check_branch
              %1688 = sbr.rel target = $region78
            $region77: #{four_mlp_forward.1} parent=62 // pred_region
              _
            $region78: #{four_mlp_forward.1} parent=62 // pred_fallthru
              _
          $region63: #{four_mlp_forward.1} parent=58 // pred_fallthru
            _
          %1689 = vnop
        $region59: #{four_mlp_forward.1} parent=50 // pred_fallthru
          _
      $region51: #{four_mlp_forward.1} parent=5 // pred_fallthru
        _
      %p1690 = scmp.le.s32.totalorder 2, %s9
      // Predicated region
      $region79: #{four_mlp_forward.1} parent=5 // pred_check
        %p1691 = pneg %p1690
      $region80: #{four_mlp_forward.1} parent=5 // pred_check_branch
        %1693 = sbr.rel (%p1691) target = $region82
      $region81: #{four_mlp_forward.1} parent=5 // pred_region
        %s1694 = ssub.s32 %s9, 2
        // Predicated region
        $region83: #{four_mlp_forward.1} parent=81 // pred_check
          %p1695 = pneg %p106
        $region84: #{four_mlp_forward.1} parent=81 // pred_check_branch
          %1697 = sbr.rel (%p1695) target = $region86
        $region85: #{four_mlp_forward.1} parent=81 // pred_region
          %s1698 = sand.u32 %s91, 1
          %s1699 = sand.u32 %s91, 1
          %s1700 = smul.addr %s1699, 128
          %s1701 = scalar_lea.vmem [#allocation3], %s1700
        $region86: #{four_mlp_forward.1} parent=81 // pred_fallthru
          _
      $region82: #{four_mlp_forward.1} parent=5 // pred_fallthru
        _
    $region6: #{four_mlp_forward.1} parent=1 // loop_footer
      %s13 = sadd.s32 1, %s9
    $region7: #{four_mlp_forward.1} parent=1 // loop_footer_branch
      %8 = sbr.rel target = $region3
    $region8: #{four_mlp_forward.1} parent=1 // loop_exit
      _

</llo_original>
